<compile_context>
chip_gen: v5e
topology: v5e:2x2
jax: 0.10.0
libtpu: 0.0.40
codegen_flags: <defaults>
</compile_context>

<pallas_src>
import numpy as np
import jax
import jax.numpy as jnp
from jax import lax
from jax.experimental import pallas as pl
from jax.experimental.pallas import tpu as pltpu

SIGMA = 25.0
HALF_DIM = 64            # positional-encoding half dim (PE dim = 128)
PE_DIM = 2 * HALF_DIM    # 128
FEAT = 256               # feature / condition width
HID = 256                # hidden width of both embedding MLPs
OUT_LANES = 128          # lane-padded output width (true output width = 3)


# ----------------------------------------------------------------------------
# Kernel
# ----------------------------------------------------------------------------
def scorenet_kernel(t_ref, pe_ref, x_ref, pos_ref, cond_ref,
                    w1_ref, b1_ref, wc1_ref, bc1_ref, w2_ref, wc2_ref, b2_ref,
                    wg_ref, wp_ref, out_ref):
    md = w1_ref.dtype                                  # matmul operand dtype

    # ---- fused time_embed / condition_embed MLPs (compact weights) ----
    h_t = jnp.dot(pe_ref[...].astype(md), w1_ref[...],
                  preferred_element_type=jnp.float32) + b1_ref[...]
    h_t = jnp.maximum(h_t, 0.0)                                        # [bt, 256]
    h_c = jnp.dot(cond_ref[...].astype(md), wc1_ref[...],
                  preferred_element_type=jnp.float32) + bc1_ref[...]
    h_c = jnp.maximum(h_c, 0.0)                                        # [bt, 256]
    emb = (jnp.dot(h_t.astype(md), w2_ref[...], preferred_element_type=jnp.float32)
           + jnp.dot(h_c.astype(md), wc2_ref[...], preferred_element_type=jnp.float32)
           + b2_ref[...])                                              # [bt, 256] f32

    # ---- stand-in E3 GNN readout, broadcast-add folded in ----
    # TODO(synk): E3EquivariantGNN definition not provided; edge_index / message
    # passing is not reproduced -- a deterministic per-node linear readout is used.
    # (x + emb[:, :, None]) . wg  ==  x . wg  +  (emb @ wg) broadcast over nodes.
    bt, d, f = x_ref.shape
    xw = jnp.dot(x_ref[...].reshape(bt * d, f).astype(md), wg_ref[...],
                 preferred_element_type=jnp.float32
                 ).reshape(bt, d, OUT_LANES)                           # [bt, D, 128]
    ew = jnp.dot(emb.astype(md), wg_ref[...],
                 preferred_element_type=jnp.float32)                   # [bt, 128]

    # pos @ wp (3 x 128, lane-padded): 3 unrolled VPU FMAs, no MXU pass.
    pos = pos_ref[...]                                                 # [bt, D, 3] f32
    wp = wp_ref[...]                                                   # [3, 128]  f32
    pm = (pos[..., 0:1] * wp[0:1, :]
          + pos[..., 1:2] * wp[1:2, :]
          + pos[..., 2:3] * wp[2:3, :])                                # [bt, D, 128]

    score = xw + ew[:, None, :] + pm                                   # [bt, D, 128]

    # ---- 1 / marginal_prob_std(t): rsqrt of the variance, small-t stable ----
    t = t_ref[...]                                                     # [bt, 1] f32
    log_sigma = float(np.log(SIGMA))
    a = (2.0 * log_sigma) * t
    em1 = jnp.exp(a) - 1.0
    em1 = jnp.where(a < 1e-3, a * (1.0 + 0.5 * a), em1)                # expm1-style
    inv_std = lax.rsqrt(em1 * (0.5 / log_sigma))                       # [bt, 1]

    out_ref[...] = score * inv_std[:, :, None]


# ----------------------------------------------------------------------------
# One-time parameter preparation (hoisted out of the per-call wrapper)
# ----------------------------------------------------------------------------
def prepare_params(params, matmul_dtype=jnp.bfloat16):
    """Build the kernel-ready weight set once (bias sum, lane padding, casts)."""
    md = matmul_dtype
    wg_pad = jnp.zeros((FEAT, OUT_LANES), jnp.float32).at[:, :3].set(params["wg"])
    wp_pad = jnp.zeros((3, OUT_LANES), jnp.float32).at[:, :3].set(params["wp"])
    emb_scale = np.log(10000.0) / (HALF_DIM - 1)
    freqs = jnp.asarray(
        np.exp(-emb_scale * np.arange(HALF_DIM, dtype=np.float32))).reshape(1, HALF_DIM)
    return dict(
        w1=params["w1"].astype(md),
        b1=params["b1"].astype(jnp.float32),
        wc1=params["wc1"].astype(md),
        bc1=params["bc1"].astype(jnp.float32),
        w2=params["w2"].astype(md),
        wc2=params["wc2"].astype(md),
        b2=(params["b2"] + params["bc2"]).astype(jnp.float32),   # pre-summed bias
        wg=wg_pad.astype(md),
        wp=wp_pad,
        freqs=freqs,
    )


def _default_batch_tile(B, D, md):
    """grid=(1,) on single-TC chips; split batch across the 2 TCs on v7x."""
    ncores = 1
    try:
        kind = jax.devices()[0].device_kind.lower()
        if "v7" in kind:
            ncores = 2
    except Exception:
        pass
    bt = B // ncores if (ncores > 1 and B % ncores == 0) else B
    # Keep the double-buffered x tile well inside the (v7x: 64 MiB) VMEM budget.
    # TODO(synk): for very large D, add a second ("parallel") grid axis over D.
    itemsize = jnp.dtype(md).itemsize
    budget = 24 * 1024 * 1024
    while bt > 1 and bt % 2 == 0 and 2 * bt * D * FEAT * itemsize > budget:
        bt //= 2
    return bt


# ----------------------------------------------------------------------------
# Forward wrapper
# ----------------------------------------------------------------------------
def scorenet_forward(x, pos, edge_index, t, condition, prepped, *, batch_tile=None):
    """x: [B, 256, D] (PyTorch layout), pos: [B, D, 3], t: [B], condition: [B, 256].

    `prepped` comes from prepare_params() (built once, reused across calls).
    """
    del edge_index  # unused by the stand-in GNN (see TODO in kernel)
    B, F, D = x.shape
    assert F == FEAT and condition.shape == (B, FEAT)
    # In-kernel collapse (bt, D, 256) -> (bt*D, 256) must not cross sublane tiles.
    assert D % 8 == 0, "D must be a multiple of 8 (f32 sublane tile)"

    md = prepped["w1"].dtype
    bt = batch_tile if batch_tile is not None else _default_batch_tile(B, D, md)
    assert B % bt == 0
    grid = (B // bt,)

    # ---- per-call activation prep (tiny; fuses under jit) ----
    t2 = t.reshape(B, 1).astype(jnp.float32)
    te = t2 * prepped["freqs"]
    pe = jnp.concatenate([jnp.sin(te), jnp.cos(te)], axis=1)           # [B, 128] f32

    # x in matmul dtype only when the packed reshape stays tile-aligned.
    sub_tile = 8 * (4 // jnp.dtype(md).itemsize)     # 8 (f32) / 16 (bf16)
    xd = md if D % sub_tile == 0 else jnp.float32
    # NOTE: callers that already hold x as [B, D, 256] in `md` avoid this copy.
    xT = jnp.swapaxes(x, 1, 2).astype(xd)                              # [B, D, 256]
    posf = pos.astype(jnp.float32)
    cond = condition.astype(jnp.float32)

    in_specs = [
        pl.BlockSpec((bt, 1), lambda i: (i, 0)),                 # t
        pl.BlockSpec((bt, PE_DIM), lambda i: (i, 0)),            # positional enc
        pl.BlockSpec((bt, D, FEAT), lambda i: (i, 0, 0)),        # x^T tile (lane-dense)
        pl.BlockSpec((bt, D, 3), lambda i: (i, 0, 0)),           # pos tile
        pl.BlockSpec((bt, FEAT), lambda i: (i, 0)),              # condition tile
        pl.BlockSpec((PE_DIM, HID), lambda i: (0, 0)),           # w1   (resident)
        pl.BlockSpec((1, HID), lambda i: (0, 0)),                # b1
        pl.BlockSpec((FEAT, HID), lambda i: (0, 0)),             # wc1  (resident)
        pl.BlockSpec((1, HID), lambda i: (0, 0)),                # bc1
        pl.BlockSpec((HID, HID), lambda i: (0, 0)),              # w2   (resident)
        pl.BlockSpec((HID, HID), lambda i: (0, 0)),              # wc2  (resident)
        pl.BlockSpec((1, HID), lambda i: (0, 0)),                # b2 + bc2
        pl.BlockSpec((FEAT, OUT_LANES), lambda i: (0, 0)),       # wg (lane-padded)
        pl.BlockSpec((3, OUT_LANES), lambda i: (0, 0)),          # wp (lane-padded)
    ]
    out_spec = pl.BlockSpec((bt, D, OUT_LANES), lambda i: (i, 0, 0))

    # Advisory cost estimate: lets XLA schedule neighbors around this small call.
    flops = (2 * B * (PE_DIM * HID + FEAT * HID + 2 * HID * HID)
             + 2 * B * (D + 1) * FEAT * OUT_LANES
             + 2 * B * D * 3 * OUT_LANES)
    weight_bytes = sum(int(prepped[k].size) * prepped[k].dtype.itemsize
                       for k in ("w1", "b1", "wc1", "bc1", "w2", "wc2", "b2", "wg", "wp"))
    bytes_accessed = (weight_bytes
                      + B * 4 + B * PE_DIM * 4
                      + B * D * FEAT * jnp.dtype(xd).itemsize
                      + B * D * 3 * 4 + B * FEAT * 4
                      + B * D * OUT_LANES * 4)
    cost = pl.CostEstimate(flops=int(flops), transcendentals=int(2 * B),
                           bytes_accessed=int(bytes_accessed))

    out = pl.pallas_call(
        scorenet_kernel,
        out_shape=jax.ShapeDtypeStruct((B, D, OUT_LANES), jnp.float32),
        grid_spec=pltpu.PrefetchScalarGridSpec(
            num_scalar_prefetch=0,
            grid=grid,
            in_specs=in_specs,
            out_specs=out_spec),
        compiler_params=pltpu.CompilerParams(
            dimension_semantics=("parallel",),
            vmem_limit_bytes=32 * 1024 * 1024),   # well under v7x's 64 MiB physical
        cost_estimate=cost,
    )(t2, pe, xT, posf, cond,
      prepped["w1"], prepped["b1"], prepped["wc1"], prepped["bc1"],
      prepped["w2"], prepped["wc2"], prepped["b2"], prepped["wg"], prepped["wp"])

    return out[..., :3]                                                # [B, D, 3]


# ----------------------------------------------------------------------------
# Parameters & pure-JAX reference
# ----------------------------------------------------------------------------
def make_params(key):
    """Deterministic parameter init (PyTorch-Linear-like uniform scaling).

    Weights are stored as [in, out] so y = x @ W + b matches torch's
    y = x @ W.T + b with W_torch = W.T.
    """
    def lin(k, fan_in, fan_out):
        bound = 1.0 / np.sqrt(fan_in)
        kw, kb = jax.random.split(k)
        w = jax.random.uniform(kw, (fan_in, fan_out), jnp.float32, -bound, bound)
        b = jax.random.uniform(kb, (1, fan_out), jnp.float32, -bound, bound)
        return w, b

    ks = jax.random.split(key, 6)
    w1, b1 = lin(ks[0], PE_DIM, HID)
    w2, b2 = lin(ks[1], HID, HID)
    wc1, bc1 = lin(ks[2], FEAT, HID)
    wc2, bc2 = lin(ks[3], HID, HID)
    wg = jax.random.uniform(ks[4], (FEAT, 3), jnp.float32, -0.0625, 0.0625)
    wp = jax.random.uniform(ks[5], (3, 3), jnp.float32, -0.5, 0.5)
    return dict(w1=w1, b1=b1, w2=w2, b2=b2,
                wc1=wc1, bc1=bc1, wc2=wc2, bc2=bc2, wg=wg, wp=wp)


def scorenet_reference(x, pos, t, condition, p):
    """Pure-JAX reference mirroring the PyTorch forward (batch=None case)."""
    emb_scale = np.log(10000.0) / (HALF_DIM - 1)
    freqs = jnp.exp(jnp.arange(HALF_DIM, dtype=jnp.float32) * -emb_scale)
    te = t[:, None] * freqs[None, :]
    pe = jnp.concatenate([jnp.sin(te), jnp.cos(te)], axis=1)

    h = jnp.maximum(pe @ p["w1"] + p["b1"], 0.0)
    time_emb = h @ p["w2"] + p["b2"]
    c = jnp.maximum(condition @ p["wc1"] + p["bc1"], 0.0)
    cond_emb = c @ p["wc2"] + p["bc2"]
    emb = time_emb + cond_emb

    xx = x + emb[:, :, None]
    score = (jnp.einsum('bfd,fk->bdk', xx, p["wg"])
             + jnp.einsum('bdi,ik->bdk', pos, p["wp"]))
    std = jnp.sqrt((jnp.exp(2.0 * t * np.log(SIGMA)) - 1.0) / (2.0 * np.log(SIGMA)))
    return score / std[:, None, None]


# ----------------------------------------------------------------------------
# Driver
# ----------------------------------------------------------------------------
if __name__ == "__main__":
    B, F, D = 16, FEAT, 8   # B graphs, 256 features, D atoms per graph
    key = jax.random.PRNGKey(0)
    k_x, k_pos, k_t, k_c, k_p = jax.random.split(key, 5)

    x = jax.random.normal(k_x, (B, F, D), jnp.float32)
    pos = jax.random.normal(k_pos, (B, D, 3), jnp.float32)
    # std(t) -> 0 as t -> 0; keep t >= 0.05 (same regime as the reference driver).
    t = jax.random.uniform(k_t, (B,), jnp.float32, 0.05, 1.0)
    condition = jax.random.normal(k_c, (B, F), jnp.float32)
    edge_index = jnp.zeros((2, 16), jnp.int32)  # accepted but unused (see TODO)

    params = make_params(k_p)
    ref = scorenet_reference(x, pos, t, condition, params)

    # f32 operand path: tight numerical check against the spec-mirroring reference.
    prepped_f32 = prepare_params(params, matmul_dtype=jnp.float32)
    out_f32 = jax.block_until_ready(
        scorenet_forward(x, pos, edge_index, t, condition, prepped_f32))
    np.testing.assert_allclose(np.asarray(out_f32), np.asarray(ref),
                               rtol=1e-3, atol=1e-3)

    # Default bf16 MXU-operand path (f32 accumulation; all generations): loose check.
    prepped = prepare_params(params)                     # bf16 by default
    out_bf16 = jax.block_until_ready(
        scorenet_forward(x, pos, edge_index, t, condition, prepped))
    np.testing.assert_allclose(np.asarray(out_bf16), np.asarray(ref),
                               rtol=1e-1, atol=1e-1)

    print("KERNEL_OK")
</pallas_src>

<mosaic_0001>
module attributes {stable_mosaic.version = 11 : i64} {
  func.func @scorenet_kernel(%arg0: i32, %arg1: memref<16x1xf32, #tpu.memory_space<vmem>>, %arg2: memref<16x128xf32, #tpu.memory_space<vmem>>, %arg3: memref<16x8x256xf32, #tpu.memory_space<vmem>>, %arg4: memref<16x8x3xf32, #tpu.memory_space<vmem>>, %arg5: memref<16x256xf32, #tpu.memory_space<vmem>>, %arg6: memref<128x256xf32, #tpu.memory_space<vmem>>, %arg7: memref<1x256xf32, #tpu.memory_space<vmem>>, %arg8: memref<256x256xf32, #tpu.memory_space<vmem>>, %arg9: memref<1x256xf32, #tpu.memory_space<vmem>>, %arg10: memref<256x256xf32, #tpu.memory_space<vmem>>, %arg11: memref<256x256xf32, #tpu.memory_space<vmem>>, %arg12: memref<1x256xf32, #tpu.memory_space<vmem>>, %arg13: memref<256x128xf32, #tpu.memory_space<vmem>>, %arg14: memref<3x128xf32, #tpu.memory_space<vmem>>, %arg15: memref<16x8x128xf32, #tpu.memory_space<vmem>>) attributes {dimension_semantics = [#tpu.dimension_semantics<parallel>], iteration_bounds = array<i64: 1>, scalar_prefetch = 0 : i64, scratch_operands = 0 : i64, tpu.core_type = #tpu.core_type<tc>, window_params = [{transform_indices = @transform_0, window_bounds = array<i64: 16, 1>}, {transform_indices = @transform_1, window_bounds = array<i64: 16, 128>}, {transform_indices = @transform_2, window_bounds = array<i64: 16, 8, 256>}, {transform_indices = @transform_3, window_bounds = array<i64: 16, 8, 3>}, {transform_indices = @transform_4, window_bounds = array<i64: 16, 256>}, {pipeline_mode = #tpu.pipeline_mode<synchronous>, transform_indices = @transform_5, window_bounds = array<i64: 128, 256>}, {pipeline_mode = #tpu.pipeline_mode<synchronous>, transform_indices = @transform_6, window_bounds = array<i64: 1, 256>}, {pipeline_mode = #tpu.pipeline_mode<synchronous>, transform_indices = @transform_7, window_bounds = array<i64: 256, 256>}, {pipeline_mode = #tpu.pipeline_mode<synchronous>, transform_indices = @transform_8, window_bounds = array<i64: 1, 256>}, {pipeline_mode = #tpu.pipeline_mode<synchronous>, transform_indices = @transform_9, window_bounds = array<i64: 256, 256>}, {pipeline_mode = #tpu.pipeline_mode<synchronous>, transform_indices = @transform_10, window_bounds = array<i64: 256, 256>}, {pipeline_mode = #tpu.pipeline_mode<synchronous>, transform_indices = @transform_11, window_bounds = array<i64: 1, 256>}, {pipeline_mode = #tpu.pipeline_mode<synchronous>, transform_indices = @transform_12, window_bounds = array<i64: 256, 128>}, {pipeline_mode = #tpu.pipeline_mode<synchronous>, transform_indices = @transform_13, window_bounds = array<i64: 3, 128>}, {transform_indices = @transform_14, window_bounds = array<i64: 16, 8, 128>}]} {
    %c0 = arith.constant 0 : index
    %c0_0 = arith.constant 0 : index
    %0 = vector.load %arg2[%c0, %c0_0] : memref<16x128xf32, #tpu.memory_space<vmem>>, vector<16x128xf32>
    %c0_1 = arith.constant 0 : index
    %c0_2 = arith.constant 0 : index
    %1 = vector.load %arg6[%c0_1, %c0_2] : memref<128x256xf32, #tpu.memory_space<vmem>>, vector<128x256xf32>
    %cst = arith.constant dense<0.000000e+00> : vector<16x256xf32>
    %2 = tpu.matmul %0, %1, %cst {dimension_numbers = #tpu.dot_dimension_numbers<[1], [0], [0], [1], [0, 0, 1, 1], [], []>} : vector<16x128xf32>, vector<128x256xf32>, vector<16x256xf32> -> vector<16x256xf32>
    %c0_3 = arith.constant 0 : index
    %c0_4 = arith.constant 0 : index
    %3 = vector.load %arg7[%c0_3, %c0_4] : memref<1x256xf32, #tpu.memory_space<vmem>>, vector<1x256xf32>
    %4 = vector.broadcast %3 : vector<1x256xf32> to vector<16x256xf32>
    %5 = arith.addf %2, %4 : vector<16x256xf32>
    %cst_5 = arith.constant 0.000000e+00 : f32
    %6 = vector.broadcast %cst_5 : f32 to vector<16x256xf32>
    %7 = arith.maximumf %5, %6 : vector<16x256xf32>
    %c0_6 = arith.constant 0 : index
    %c0_7 = arith.constant 0 : index
    %8 = vector.load %arg5[%c0_6, %c0_7] : memref<16x256xf32, #tpu.memory_space<vmem>>, vector<16x256xf32>
    %c0_8 = arith.constant 0 : index
    %c0_9 = arith.constant 0 : index
    %9 = vector.load %arg8[%c0_8, %c0_9] : memref<256x256xf32, #tpu.memory_space<vmem>>, vector<256x256xf32>
    %cst_10 = arith.constant dense<0.000000e+00> : vector<16x256xf32>
    %10 = tpu.matmul %8, %9, %cst_10 {dimension_numbers = #tpu.dot_dimension_numbers<[1], [0], [0], [1], [0, 0, 1, 1], [], []>} : vector<16x256xf32>, vector<256x256xf32>, vector<16x256xf32> -> vector<16x256xf32>
    %c0_11 = arith.constant 0 : index
    %c0_12 = arith.constant 0 : index
    %11 = vector.load %arg9[%c0_11, %c0_12] : memref<1x256xf32, #tpu.memory_space<vmem>>, vector<1x256xf32>
    %12 = vector.broadcast %11 : vector<1x256xf32> to vector<16x256xf32>
    %13 = arith.addf %10, %12 : vector<16x256xf32>
    %cst_13 = arith.constant 0.000000e+00 : f32
    %14 = vector.broadcast %cst_13 : f32 to vector<16x256xf32>
    %15 = arith.maximumf %13, %14 : vector<16x256xf32>
    %c0_14 = arith.constant 0 : index
    %c0_15 = arith.constant 0 : index
    %16 = vector.load %arg10[%c0_14, %c0_15] : memref<256x256xf32, #tpu.memory_space<vmem>>, vector<256x256xf32>
    %cst_16 = arith.constant dense<0.000000e+00> : vector<16x256xf32>
    %17 = tpu.matmul %7, %16, %cst_16 {dimension_numbers = #tpu.dot_dimension_numbers<[1], [0], [0], [1], [0, 0, 1, 1], [], []>} : vector<16x256xf32>, vector<256x256xf32>, vector<16x256xf32> -> vector<16x256xf32>
    %c0_17 = arith.constant 0 : index
    %c0_18 = arith.constant 0 : index
    %18 = vector.load %arg11[%c0_17, %c0_18] : memref<256x256xf32, #tpu.memory_space<vmem>>, vector<256x256xf32>
    %cst_19 = arith.constant dense<0.000000e+00> : vector<16x256xf32>
    %19 = tpu.matmul %15, %18, %cst_19 {dimension_numbers = #tpu.dot_dimension_numbers<[1], [0], [0], [1], [0, 0, 1, 1], [], []>} : vector<16x256xf32>, vector<256x256xf32>, vector<16x256xf32> -> vector<16x256xf32>
    %20 = arith.addf %17, %19 : vector<16x256xf32>
    %c0_20 = arith.constant 0 : index
    %c0_21 = arith.constant 0 : index
    %21 = vector.load %arg12[%c0_20, %c0_21] : memref<1x256xf32, #tpu.memory_space<vmem>>, vector<1x256xf32>
    %22 = vector.broadcast %21 : vector<1x256xf32> to vector<16x256xf32>
    %23 = arith.addf %20, %22 : vector<16x256xf32>
    %c0_22 = arith.constant 0 : index
    %c0_23 = arith.constant 0 : index
    %c0_24 = arith.constant 0 : index
    %24 = vector.load %arg3[%c0_22, %c0_23, %c0_24] : memref<16x8x256xf32, #tpu.memory_space<vmem>>, vector<16x8x256xf32>
    %25 = vector.shape_cast %24 : vector<16x8x256xf32> to vector<128x256xf32>
    %c0_25 = arith.constant 0 : index
    %c0_26 = arith.constant 0 : index
    %26 = vector.load %arg13[%c0_25, %c0_26] : memref<256x128xf32, #tpu.memory_space<vmem>>, vector<256x128xf32>
    %cst_27 = arith.constant dense<0.000000e+00> : vector<128x128xf32>
    %27 = tpu.matmul %25, %26, %cst_27 {dimension_numbers = #tpu.dot_dimension_numbers<[1], [0], [0], [1], [0, 0, 1, 1], [], []>} : vector<128x256xf32>, vector<256x128xf32>, vector<128x128xf32> -> vector<128x128xf32>
    %28 = vector.shape_cast %27 : vector<128x128xf32> to vector<16x8x128xf32>
    %c0_28 = arith.constant 0 : index
    %c0_29 = arith.constant 0 : index
    %29 = vector.load %arg13[%c0_28, %c0_29] : memref<256x128xf32, #tpu.memory_space<vmem>>, vector<256x128xf32>
    %cst_30 = arith.constant dense<0.000000e+00> : vector<16x128xf32>
    %30 = tpu.matmul %23, %29, %cst_30 {dimension_numbers = #tpu.dot_dimension_numbers<[1], [0], [0], [1], [0, 0, 1, 1], [], []>} : vector<16x256xf32>, vector<256x128xf32>, vector<16x128xf32> -> vector<16x128xf32>
    %c0_31 = arith.constant 0 : index
    %c0_32 = arith.constant 0 : index
    %c0_33 = arith.constant 0 : index
    %31 = vector.load %arg4[%c0_31, %c0_32, %c0_33] : memref<16x8x3xf32, #tpu.memory_space<vmem>>, vector<16x8x3xf32>
    %c0_34 = arith.constant 0 : index
    %c0_35 = arith.constant 0 : index
    %32 = vector.load %arg14[%c0_34, %c0_35] : memref<3x128xf32, #tpu.memory_space<vmem>>, vector<3x128xf32>
    %33 = vector.extract_strided_slice %31 {offsets = [0, 0, 0], sizes = [16, 8, 1], strides = [1, 1, 1]} : vector<16x8x3xf32> to vector<16x8x1xf32>
    %34 = vector.extract_strided_slice %32 {offsets = [0, 0], sizes = [1, 128], strides = [1, 1]} : vector<3x128xf32> to vector<1x128xf32>
    %35 = vector.shape_cast %34 : vector<1x128xf32> to vector<1x1x128xf32>
    %36 = vector.broadcast %33 : vector<16x8x1xf32> to vector<16x8x128xf32>
    %37 = vector.broadcast %35 : vector<1x1x128xf32> to vector<16x8x128xf32>
    %38 = arith.mulf %36, %37 : vector<16x8x128xf32>
    %39 = vector.extract_strided_slice %31 {offsets = [0, 0, 1], sizes = [16, 8, 1], strides = [1, 1, 1]} : vector<16x8x3xf32> to vector<16x8x1xf32>
    %40 = vector.extract_strided_slice %32 {offsets = [1, 0], sizes = [1, 128], strides = [1, 1]} : vector<3x128xf32> to vector<1x128xf32>
    %41 = vector.shape_cast %40 : vector<1x128xf32> to vector<1x1x128xf32>
    %42 = vector.broadcast %39 : vector<16x8x1xf32> to vector<16x8x128xf32>
    %43 = vector.broadcast %41 : vector<1x1x128xf32> to vector<16x8x128xf32>
    %44 = arith.mulf %42, %43 : vector<16x8x128xf32>
    %45 = arith.addf %38, %44 : vector<16x8x128xf32>
    %46 = vector.extract_strided_slice %31 {offsets = [0, 0, 2], sizes = [16, 8, 1], strides = [1, 1, 1]} : vector<16x8x3xf32> to vector<16x8x1xf32>
    %47 = vector.extract_strided_slice %32 {offsets = [2, 0], sizes = [1, 128], strides = [1, 1]} : vector<3x128xf32> to vector<1x128xf32>
    %48 = vector.shape_cast %47 : vector<1x128xf32> to vector<1x1x128xf32>
    %49 = vector.broadcast %46 : vector<16x8x1xf32> to vector<16x8x128xf32>
    %50 = vector.broadcast %48 : vector<1x1x128xf32> to vector<16x8x128xf32>
    %51 = arith.mulf %49, %50 : vector<16x8x128xf32>
    %52 = arith.addf %45, %51 : vector<16x8x128xf32>
    %53 = vector.shape_cast %30 : vector<16x128xf32> to vector<16x1x128xf32>
    %54 = vector.broadcast %53 : vector<16x1x128xf32> to vector<16x8x128xf32>
    %55 = arith.addf %28, %54 : vector<16x8x128xf32>
    %56 = arith.addf %55, %52 : vector<16x8x128xf32>
    %c0_36 = arith.constant 0 : index
    %c0_37 = arith.constant 0 : index
    %57 = vector.load %arg1[%c0_36, %c0_37] : memref<16x1xf32, #tpu.memory_space<vmem>>, vector<16x1xf32>
    %cst_38 = arith.constant 6.43775177 : f32
    %58 = vector.broadcast %cst_38 : f32 to vector<16x1xf32>
    %59 = arith.mulf %58, %57 : vector<16x1xf32>
    %60 = math.exp %59 : vector<16x1xf32>
    %cst_39 = arith.constant 1.000000e+00 : f32
    %61 = vector.broadcast %cst_39 : f32 to vector<16x1xf32>
    %62 = arith.subf %60, %61 : vector<16x1xf32>
    %cst_40 = arith.constant 1.000000e-03 : f32
    %63 = vector.broadcast %cst_40 : f32 to vector<16x1xf32>
    %64 = arith.cmpf olt, %59, %63 : vector<16x1xf32>
    %cst_41 = arith.constant 5.000000e-01 : f32
    %65 = vector.broadcast %cst_41 : f32 to vector<16x1xf32>
    %66 = arith.mulf %65, %59 : vector<16x1xf32>
    %cst_42 = arith.constant 1.000000e+00 : f32
    %67 = vector.broadcast %cst_42 : f32 to vector<16x1xf32>
    %68 = arith.addf %67, %66 : vector<16x1xf32>
    %69 = arith.mulf %59, %68 : vector<16x1xf32>
    %70 = arith.select %64, %69, %62 : vector<16x1xi1>, vector<16x1xf32>
    %cst_43 = arith.constant 0.155333728 : f32
    %71 = vector.broadcast %cst_43 : f32 to vector<16x1xf32>
    %72 = arith.mulf %70, %71 : vector<16x1xf32>
    %73 = math.rsqrt %72 : vector<16x1xf32>
    %74 = vector.shape_cast %73 : vector<16x1xf32> to vector<16x1x1xf32>
    %75 = vector.broadcast %74 : vector<16x1x1xf32> to vector<16x8x128xf32>
    %76 = arith.mulf %56, %75 : vector<16x8x128xf32>
    %c0_44 = arith.constant 0 : index
    %c0_45 = arith.constant 0 : index
    %c0_46 = arith.constant 0 : index
    %77 = vector.load %arg15[%c0_44, %c0_45, %c0_46] : memref<16x8x128xf32, #tpu.memory_space<vmem>>, vector<16x8x128xf32>
    tpu.vector_store %arg15[%c0_44, %c0_45, %c0_46], %76 {strides = array<i32>} : memref<16x8x128xf32, #tpu.memory_space<vmem>>, vector<16x8x128xf32>,
    return
  }
  func.func @transform_0(%arg0: i32) -> (i32, i32) {
    %c0_i32 = arith.constant 0 : i32
    %c0_i32_0 = arith.constant 0 : i32
    return %arg0, %c0_i32 : i32, i32
  }
  func.func @transform_1(%arg0: i32) -> (i32, i32) {
    %c0_i32 = arith.constant 0 : i32
    %c0_i32_0 = arith.constant 0 : i32
    return %arg0, %c0_i32 : i32, i32
  }
  func.func @transform_2(%arg0: i32) -> (i32, i32, i32) {
    %c0_i32 = arith.constant 0 : i32
    %c0_i32_0 = arith.constant 0 : i32
    %c0_i32_1 = arith.constant 0 : i32
    return %arg0, %c0_i32, %c0_i32_0 : i32, i32, i32
  }
  func.func @transform_3(%arg0: i32) -> (i32, i32, i32) {
    %c0_i32 = arith.constant 0 : i32
    %c0_i32_0 = arith.constant 0 : i32
    %c0_i32_1 = arith.constant 0 : i32
    return %arg0, %c0_i32, %c0_i32_0 : i32, i32, i32
  }
  func.func @transform_4(%arg0: i32) -> (i32, i32) {
    %c0_i32 = arith.constant 0 : i32
    %c0_i32_0 = arith.constant 0 : i32
    return %arg0, %c0_i32 : i32, i32
  }
  func.func @transform_5(%arg0: i32) -> (i32, i32) {
    %c0_i32 = arith.constant 0 : i32
    %c0_i32_0 = arith.constant 0 : i32
    %c0_i32_1 = arith.constant 0 : i32
    return %c0_i32, %c0_i32_0 : i32, i32
  }
  func.func @transform_6(%arg0: i32) -> (i32, i32) {
    %c0_i32 = arith.constant 0 : i32
    %c0_i32_0 = arith.constant 0 : i32
    %c0_i32_1 = arith.constant 0 : i32
    return %c0_i32, %c0_i32_0 : i32, i32
  }
  func.func @transform_7(%arg0: i32) -> (i32, i32) {
    %c0_i32 = arith.constant 0 : i32
    %c0_i32_0 = arith.constant 0 : i32
    %c0_i32_1 = arith.constant 0 : i32
    return %c0_i32, %c0_i32_0 : i32, i32
  }
  func.func @transform_8(%arg0: i32) -> (i32, i32) {
    %c0_i32 = arith.constant 0 : i32
    %c0_i32_0 = arith.constant 0 : i32
    %c0_i32_1 = arith.constant 0 : i32
    return %c0_i32, %c0_i32_0 : i32, i32
  }
  func.func @transform_9(%arg0: i32) -> (i32, i32) {
    %c0_i32 = arith.constant 0 : i32
    %c0_i32_0 = arith.constant 0 : i32
    %c0_i32_1 = arith.constant 0 : i32
    return %c0_i32, %c0_i32_0 : i32, i32
  }
  func.func @transform_10(%arg0: i32) -> (i32, i32) {
    %c0_i32 = arith.constant 0 : i32
    %c0_i32_0 = arith.constant 0 : i32
    %c0_i32_1 = arith.constant 0 : i32
    return %c0_i32, %c0_i32_0 : i32, i32
  }
  func.func @transform_11(%arg0: i32) -> (i32, i32) {
    %c0_i32 = arith.constant 0 : i32
    %c0_i32_0 = arith.constant 0 : i32
    %c0_i32_1 = arith.constant 0 : i32
    return %c0_i32, %c0_i32_0 : i32, i32
  }
  func.func @transform_12(%arg0: i32) -> (i32, i32) {
    %c0_i32 = arith.constant 0 : i32
    %c0_i32_0 = arith.constant 0 : i32
    %c0_i32_1 = arith.constant 0 : i32
    return %c0_i32, %c0_i32_0 : i32, i32
  }
  func.func @transform_13(%arg0: i32) -> (i32, i32) {
    %c0_i32 = arith.constant 0 : i32
    %c0_i32_0 = arith.constant 0 : i32
    %c0_i32_1 = arith.constant 0 : i32
    return %c0_i32, %c0_i32_0 : i32, i32
  }
  func.func @transform_14(%arg0: i32) -> (i32, i32, i32) {
    %c0_i32 = arith.constant 0 : i32
    %c0_i32_0 = arith.constant 0 : i32
    %c0_i32_1 = arith.constant 0 : i32
    return %arg0, %c0_i32, %c0_i32_0 : i32, i32, i32
  }
}

</mosaic_0001>

<llo_original>
// kernel: tpu_custom_call.1
$region0: #{tpu_custom_call.1}
  #allocation0 [shape = 'u32[]', space=smem, size = 0x4, offset = 0x4, fixed_abs, tag = 'smem constant byte address 0x4 - core index']
  #allocation1 [shape = 'u32[72,128]{1,0:T(1,128)}', space=vmem, size = 0x9000, scoped, tag = 'internal scratch']
  %s0 = inlined_call_operand.vmem [shape: f32[16,1], index: 0, kind: input, shape index: {}]
  %s1 = inlined_call_operand.vmem [shape: f32[16,128], index: 1, kind: input, shape index: {}]
  %s2 = inlined_call_operand.hbm [shape: f32[16,8,256], index: 2, kind: input, shape index: {}]
  %s3 = inlined_call_operand.vmem [shape: f32[16,8,3], index: 3, kind: input, shape index: {}]
  %s4 = inlined_call_operand.vmem [shape: f32[16,256], index: 4, kind: input, shape index: {}]
  %s5 = inlined_call_operand.hbm [shape: f32[128,256], index: 5, kind: input, shape index: {}]
  %s6 = inlined_call_operand.vmem [shape: f32[1,256], index: 6, kind: input, shape index: {}]
  %s7 = inlined_call_operand.hbm [shape: f32[256,256], index: 7, kind: input, shape index: {}]
  %s8 = inlined_call_operand.vmem [shape: f32[1,256], index: 8, kind: input, shape index: {}]
  %s9 = inlined_call_operand.hbm [shape: f32[256,256], index: 9, kind: input, shape index: {}]
  %s10 = inlined_call_operand.hbm [shape: f32[256,256], index: 10, kind: input, shape index: {}]
  %s11 = inlined_call_operand.vmem [shape: f32[1,256], index: 11, kind: input, shape index: {}]
  %s12 = inlined_call_operand.hbm [shape: f32[256,128], index: 12, kind: input, shape index: {}]
  %s13 = inlined_call_operand.vmem [shape: f32[3,128], index: 13, kind: input, shape index: {}]
  %s14 = inlined_call_operand.hbm [shape: f32[16,8,128], index: 14, kind: output, shape index: {}]
  %s15 = sld [smem:[#allocation0]]
  $region90: #{tpu_custom_call.1} parent=0
    _
  %s17 = ssub.s32 1, %s15
  %s18 = scalar_select 0, %s17, %s15
  $region1: #{tpu_custom_call.1} parent=0
    #allocation2 [shape = 'u8[131072]{0}', space=vmem, size = 0x20000, scoped, tag = 'input window, operand 2, single buffered']
    #allocation3 [shape = 's32[1]{0}', space=sflag, size = 0x4, scoped, tag = 'scoped memory for tpu_custom_call.1']
    #allocation4 [shape = 's32[1]{0}', space=sflag, size = 0x4, scoped, tag = 'scoped memory for tpu_custom_call.1']
    #allocation5 [shape = 'u8[131072]{0}', space=vmem, size = 0x20000, scoped, tag = 'input window, operand 5, single buffered']
    #allocation6 [shape = 's32[1]{0}', space=sflag, size = 0x4, scoped, tag = 'scoped memory for tpu_custom_call.1']
    #allocation7 [shape = 'u8[262144]{0}', space=vmem, size = 0x40000, scoped, tag = 'input window, operand 7, single buffered']
    #allocation8 [shape = 'u8[262144]{0}', space=vmem, size = 0x40000, scoped, tag = 'input window, operand 9, single buffered']
    #allocation9 [shape = 's32[1]{0}', space=sflag, size = 0x4, scoped, tag = 'scoped memory for tpu_custom_call.1']
    #allocation10 [shape = 'u8[262144]{0}', space=vmem, size = 0x40000, scoped, tag = 'input window, operand 10, single buffered']
    #allocation11 [shape = 'u8[131072]{0}', space=vmem, size = 0x20000, scoped, tag = 'input window, operand 12, single buffered']
    #allocation12 [shape = 's32[1]{0}', space=sflag, size = 0x4, scoped, tag = 'scoped memory for tpu_custom_call.1']
    #allocation13 [shape = 'u8[65536]{0}', space=vmem, size = 0x10000, scoped, tag = 'output window, operand 0, single buffered']
    %19 = vsyncpa [#allocation3], 0
    %20 = vsyncpa [#allocation6], 0
    %21 = vsyncpa [#allocation9], 0
    %22 = vsyncpa [#allocation12], 0
    %23 = vsyncpa [#allocation4], 0
    // Predicated region
    $region2: #{tpu_custom_call.1} parent=1 // pred_check
      _
    $region3: #{tpu_custom_call.1} parent=1 // pred_check_branch
      %25 = sbr.rel (0) target = $region5
    $region4: #{tpu_custom_call.1} parent=1 // pred_region
      _
    $region5: #{tpu_custom_call.1} parent=1 // pred_fallthru
      _
    // Predicated region
    $region6: #{tpu_custom_call.1} parent=1 // pred_check
      _
    $region7: #{tpu_custom_call.1} parent=1 // pred_check_branch
      %27 = sbr.rel (0) target = $region9
    $region8: #{tpu_custom_call.1} parent=1 // pred_region
      _
    $region9: #{tpu_custom_call.1} parent=1 // pred_fallthru
      _
    // Predicated region
    $region10: #{tpu_custom_call.1} parent=1 // pred_check
      _
    $region11: #{tpu_custom_call.1} parent=1 // pred_check_branch
      %29 = sbr.rel (0) target = $region13
    $region12: #{tpu_custom_call.1} parent=1 // pred_region
      %31 = vsyncadd [#allocation3], 0
      %s32 = sshll.u32 %s2, 4
      %s33 = int_to_ptr.hbm [resolvable:$true] %s32
      %s34 = sshll.u32 [#allocation2], 4
      %s35 = int_to_ptr.vmem [resolvable:$true] %s34
      %40 = dma.hbm_to_vmem [thread:$0]  %s33, 4096, %s35, [#allocation3], 256, 256, 16
    $region13: #{tpu_custom_call.1} parent=1 // pred_fallthru
      _
    // Predicated region
    $region14: #{tpu_custom_call.1} parent=1 // pred_check
      _
    $region15: #{tpu_custom_call.1} parent=1 // pred_check_branch
      %42 = sbr.rel (0) target = $region17
    $region16: #{tpu_custom_call.1} parent=1 // pred_region
      _
    $region17: #{tpu_custom_call.1} parent=1 // pred_fallthru
      _
    // Predicated region
    $region18: #{tpu_custom_call.1} parent=1 // pred_check
      _
    $region19: #{tpu_custom_call.1} parent=1 // pred_check_branch
      %44 = sbr.rel (0) target = $region21
    $region20: #{tpu_custom_call.1} parent=1 // pred_region
      _
    $region21: #{tpu_custom_call.1} parent=1 // pred_fallthru
      _
    // Predicated region
    $region22: #{tpu_custom_call.1} parent=1 // pred_check
      _
    $region23: #{tpu_custom_call.1} parent=1 // pred_check_branch
      %46 = sbr.rel (0) target = $region25
    $region24: #{tpu_custom_call.1} parent=1 // pred_region
      %48 = vsyncadd [#allocation6], 0
      %s49 = sshll.u32 %s5, 4
      %s50 = int_to_ptr.hbm [resolvable:$true] %s49
      %s51 = sshll.u32 [#allocation5], 4
      %s52 = int_to_ptr.vmem [resolvable:$true] %s51
      %57 = dma.hbm_to_vmem [thread:$0]  %s50, 4096, %s52, [#allocation6], 256, 256, 16
    $region25: #{tpu_custom_call.1} parent=1 // pred_fallthru
      _
    // Predicated region
    $region26: #{tpu_custom_call.1} parent=1 // pred_check
      _
    $region27: #{tpu_custom_call.1} parent=1 // pred_check_branch
      %59 = sbr.rel (0) target = $region29
    $region28: #{tpu_custom_call.1} parent=1 // pred_region
      _
    $region29: #{tpu_custom_call.1} parent=1 // pred_fallthru
      _
    // Predicated region
    $region30: #{tpu_custom_call.1} parent=1 // pred_check
      _
    $region31: #{tpu_custom_call.1} parent=1 // pred_check_branch
      %61 = sbr.rel (0) target = $region33
    $region32: #{tpu_custom_call.1} parent=1 // pred_region
      %63 = vsyncadd [#allocation6], 0
      %s64 = sshll.u32 %s7, 4
      %s65 = int_to_ptr.hbm [resolvable:$true] %s64
      %s66 = sshll.u32 [#allocation7], 4
      %s67 = int_to_ptr.vmem [resolvable:$true] %s66
      %72 = dma.hbm_to_vmem [thread:$0]  %s65, 8192, %s67, [#allocation6], 256, 256, 16
    $region33: #{tpu_custom_call.1} parent=1 // pred_fallthru
      _
    // Predicated region
    $region34: #{tpu_custom_call.1} parent=1 // pred_check
      _
    $region35: #{tpu_custom_call.1} parent=1 // pred_check_branch
      %74 = sbr.rel (0) target = $region37
    $region36: #{tpu_custom_call.1} parent=1 // pred_region
      _
    $region37: #{tpu_custom_call.1} parent=1 // pred_fallthru
      _
    // Predicated region
    $region38: #{tpu_custom_call.1} parent=1 // pred_check
      _
    $region39: #{tpu_custom_call.1} parent=1 // pred_check_branch
      %76 = sbr.rel (0) target = $region41
    $region40: #{tpu_custom_call.1} parent=1 // pred_region
      %78 = vsyncadd [#allocation9], 0
      %s79 = sshll.u32 %s9, 4
      %s80 = int_to_ptr.hbm [resolvable:$true] %s79
      %s81 = sshll.u32 [#allocation8], 4
      %s82 = int_to_ptr.vmem [resolvable:$true] %s81
      %87 = dma.hbm_to_vmem [thread:$0]  %s80, 8192, %s82, [#allocation9], 256, 256, 16
    $region41: #{tpu_custom_call.1} parent=1 // pred_fallthru
      _
    // Predicated region
    $region42: #{tpu_custom_call.1} parent=1 // pred_check
      _
    $region43: #{tpu_custom_call.1} parent=1 // pred_check_branch
      %89 = sbr.rel (0) target = $region45
    $region44: #{tpu_custom_call.1} parent=1 // pred_region
      %91 = vsyncadd [#allocation9], 0
      %s92 = sshll.u32 %s10, 4
      %s93 = int_to_ptr.hbm [resolvable:$true] %s92
      %s94 = sshll.u32 [#allocation10], 4
      %s95 = int_to_ptr.vmem [resolvable:$true] %s94
      %100 = dma.hbm_to_vmem [thread:$0]  %s93, 8192, %s95, [#allocation9], 256, 256, 16
    $region45: #{tpu_custom_call.1} parent=1 // pred_fallthru
      _
    // Predicated region
    $region46: #{tpu_custom_call.1} parent=1 // pred_check
      _
    $region47: #{tpu_custom_call.1} parent=1 // pred_check_branch
      %102 = sbr.rel (0) target = $region49
    $region48: #{tpu_custom_call.1} parent=1 // pred_region
      _
    $region49: #{tpu_custom_call.1} parent=1 // pred_fallthru
      _
    // Predicated region
    $region50: #{tpu_custom_call.1} parent=1 // pred_check
      _
    $region51: #{tpu_custom_call.1} parent=1 // pred_check_branch
      %104 = sbr.rel (0) target = $region53
    $region52: #{tpu_custom_call.1} parent=1 // pred_region
      %106 = vsyncadd [#allocation12], 0
      %s107 = sshll.u32 %s12, 4
      %s108 = int_to_ptr.hbm [resolvable:$true] %s107
      %s109 = sshll.u32 [#allocation11], 4
      %s110 = int_to_ptr.vmem [resolvable:$true] %s109
      %115 = dma.hbm_to_vmem [thread:$0]  %s108, 4096, %s110, [#allocation12], 128, 128, 8
    $region53: #{tpu_custom_call.1} parent=1 // pred_fallthru
      _
    // Predicated region
    $region54: #{tpu_custom_call.1} parent=1 // pred_check
      _
    $region55: #{tpu_custom_call.1} parent=1 // pred_check_branch
      %117 = sbr.rel (0) target = $region57
    $region56: #{tpu_custom_call.1} parent=1 // pred_region
      _
    $region57: #{tpu_custom_call.1} parent=1 // pred_fallthru
      _
    // Predicated region
    $region58: #{tpu_custom_call.1} parent=1 // pred_check
      _
    $region59: #{tpu_custom_call.1} parent=1 // pred_check_branch
      %119 = sbr.rel (0) target = $region61
    $region60: #{tpu_custom_call.1} parent=1 // pred_region
      %121 = dma.done [#allocation3], 4096
    $region61: #{tpu_custom_call.1} parent=1 // pred_fallthru
      _
    // Predicated region
    $region62: #{tpu_custom_call.1} parent=1 // pred_check
      _
    $region63: #{tpu_custom_call.1} parent=1 // pred_check_branch
      %123 = sbr.rel (0) target = $region65
    $region64: #{tpu_custom_call.1} parent=1 // pred_region
      %125 = dma.done [#allocation6], 4096
    $region65: #{tpu_custom_call.1} parent=1 // pred_fallthru
      _
    // Predicated region
    $region66: #{tpu_custom_call.1} parent=1 // pred_check
      _
    $region67: #{tpu_custom_call.1} parent=1 // pred_check_branch
      %127 = sbr.rel (0) target = $region69
    $region68: #{tpu_custom_call.1} parent=1 // pred_region
      %129 = dma.done [#allocation6], 8192
    $region69: #{tpu_custom_call.1} parent=1 // pred_fallthru
      _
    // Predicated region
    $region70: #{tpu_custom_call.1} parent=1 // pred_check
      _
    $region71: #{tpu_custom_call.1} parent=1 // pred_check_branch
      %131 = sbr.rel (0) target = $region73
    $region72: #{tpu_custom_call.1} parent=1 // pred_region
      %133 = dma.done [#allocation9], 8192
    $region73: #{tpu_custom_call.1} parent=1 // pred_fallthru
      _
    // Predicated region
    $region74: #{tpu_custom_call.1} parent=1 // pred_check
      _
    $region75: #{tpu_custom_call.1} parent=1 // pred_check_branch
      %135 = sbr.rel (0) target = $region77
    $region76: #{tpu_custom_call.1} parent=1 // pred_region
      %137 = dma.done [#allocation9], 8192
    $region77: #{tpu_custom_call.1} parent=1 // pred_fallthru
      _
    // Predicated region
    $region78: #{tpu_custom_call.1} parent=1 // pred_check
      _
    $region79: #{tpu_custom_call.1} parent=1 // pred_check_branch
      %139 = sbr.rel (0) target = $region81
    $region80: #{tpu_custom_call.1} parent=1 // pred_region
      %141 = dma.done [#allocation12], 4096
    $region81: #{tpu_custom_call.1} parent=1 // pred_fallthru
      _
    %v142 = vld [vmem:[%s1] sm:$0xff]
    %v143 = vld [vmem:[%s1 + $0x8] sm:$0xff]
    %v144 = vld [vmem:[#allocation5] sm:$0xff]
    %v145 = vld [vmem:[#allocation5 + $0x8] sm:$0xff]
    %v146 = vld [vmem:[#allocation5 + $0x10] sm:$0xff]
    %v147 = vld [vmem:[#allocation5 + $0x18] sm:$0xff]
    %v148 = vld [vmem:[#allocation5 + $0x20] sm:$0xff]
    %v149 = vld [vmem:[#allocation5 + $0x28] sm:$0xff]
    %v150 = vld [vmem:[#allocation5 + $0x30] sm:$0xff]
    %v151 = vld [vmem:[#allocation5 + $0x38] sm:$0xff]
    %v152 = vld [vmem:[#allocation5 + $0x40] sm:$0xff]
    %v153 = vld [vmem:[#allocation5 + $0x48] sm:$0xff]
    %v154 = vld [vmem:[#allocation5 + $0x50] sm:$0xff]
    %v155 = vld [vmem:[#allocation5 + $0x58] sm:$0xff]
    %v156 = vld [vmem:[#allocation5 + $0x60] sm:$0xff]
    %v157 = vld [vmem:[#allocation5 + $0x68] sm:$0xff]
    %v158 = vld [vmem:[#allocation5 + $0x70] sm:$0xff]
    %v159 = vld [vmem:[#allocation5 + $0x78] sm:$0xff]
    %v160 = vld [vmem:[#allocation5 + $0x80] sm:$0xff]
    %v161 = vld [vmem:[#allocation5 + $0x88] sm:$0xff]
    %v162 = vld [vmem:[#allocation5 + $0x90] sm:$0xff]
    %v163 = vld [vmem:[#allocation5 + $0x98] sm:$0xff]
    %v164 = vld [vmem:[#allocation5 + $0xa0] sm:$0xff]
    %v165 = vld [vmem:[#allocation5 + $0xa8] sm:$0xff]
    %v166 = vld [vmem:[#allocation5 + $0xb0] sm:$0xff]
    %v167 = vld [vmem:[#allocation5 + $0xb8] sm:$0xff]
    %v168 = vld [vmem:[#allocation5 + $0xc0] sm:$0xff]
    %v169 = vld [vmem:[#allocation5 + $0xc8] sm:$0xff]
    %v170 = vld [vmem:[#allocation5 + $0xd0] sm:$0xff]
    %v171 = vld [vmem:[#allocation5 + $0xd8] sm:$0xff]
    %v172 = vld [vmem:[#allocation5 + $0xe0] sm:$0xff]
    %v173 = vld [vmem:[#allocation5 + $0xe8] sm:$0xff]
    %v174 = vld [vmem:[#allocation5 + $0xf0] sm:$0xff]
    %v175 = vld [vmem:[#allocation5 + $0xf8] sm:$0xff]
    %v176 = vld [vmem:[%s6] sm:$0x3]
    %v178 = vperm.slane %v176, 0
    %v179 = vperm.slane %v176, 1
    %182 = vmatpush.msra.mxu0 %v174
    %183 = vmatpush.msra.mxu0 %v172
    %184 = vmatpush.msra.mxu0 %v170
    %185 = vmatpush.msra.mxu0 %v168
    %186 = vmatpush.msra.mxu0 %v166
    %187 = vmatpush.msra.mxu0 %v164
    %188 = vmatpush.msra.mxu0 %v162
    %189 = vmatpush.msra.mxu0 %v160
    %190 = vmatpush.msra.mxu0 %v158
    %191 = vmatpush.msra.mxu0 %v156
    %192 = vmatpush.msra.mxu0 %v154
    %193 = vmatpush.msra.mxu0 %v152
    %194 = vmatpush.msra.mxu0 %v150
    %195 = vmatpush.msra.mxu0 %v148
    %196 = vmatpush.msra.mxu0 %v146
    %197 = vmatpush.msra.mxu0 %v144
    %198 = vmatmul.f32.gmra.mxu0 %v142
    %v199 = vpop.f32.mrf.mxu0
    %v200 = vadd.f32 %v178, %v199
    %201 = vmatmul.f32.gmra.mxu0 %v143
    %v202 = vpop.f32.mrf.mxu0
    %v203 = vadd.f32 %v178, %v202
    %204 = vdwg.mxu0
    %205 = vmatpush.msra.mxu0 %v175
    %206 = vmatpush.msra.mxu0 %v173
    %207 = vmatpush.msra.mxu0 %v171
    %208 = vmatpush.msra.mxu0 %v169
    %209 = vmatpush.msra.mxu0 %v167
    %210 = vmatpush.msra.mxu0 %v165
    %211 = vmatpush.msra.mxu0 %v163
    %212 = vmatpush.msra.mxu0 %v161
    %213 = vmatpush.msra.mxu0 %v159
    %214 = vmatpush.msra.mxu0 %v157
    %215 = vmatpush.msra.mxu0 %v155
    %216 = vmatpush.msra.mxu0 %v153
    %217 = vmatpush.msra.mxu0 %v151
    %218 = vmatpush.msra.mxu0 %v149
    %219 = vmatpush.msra.mxu0 %v147
    %220 = vmatpush.msra.mxu0 %v145
    %221 = vmatmul.f32.gmra.mxu0 %v142
    %v222 = vpop.f32.mrf.mxu0
    %v223 = vadd.f32 %v179, %v222
    %224 = vmatmul.f32.gmra.mxu0 %v143
    %v225 = vpop.f32.mrf.mxu0
    %v226 = vadd.f32 %v179, %v225
    %227 = vdwg.mxu0
    %v228 = vmax.f32 %v200, 0.0
    %v229 = vmax.f32 %v223, 0.0
    %v230 = vmax.f32 %v203, 0.0
    %v231 = vmax.f32 %v226, 0.0
    %v232 = vld [vmem:[%s4] sm:$0xff]
    %v233 = vld [vmem:[%s4 + $0x8] sm:$0xff]
    %v234 = vld [vmem:[%s4 + $0x10] sm:$0xff]
    %v235 = vld [vmem:[%s4 + $0x18] sm:$0xff]
    %v236 = vld [vmem:[#allocation7] sm:$0xff]
    %v237 = vld [vmem:[#allocation7 + $0x8] sm:$0xff]
    %v238 = vld [vmem:[#allocation7 + $0x10] sm:$0xff]
    %v239 = vld [vmem:[#allocation7 + $0x18] sm:$0xff]
    %v240 = vld [vmem:[#allocation7 + $0x20] sm:$0xff]
    %v241 = vld [vmem:[#allocation7 + $0x28] sm:$0xff]
    %v242 = vld [vmem:[#allocation7 + $0x30] sm:$0xff]
    %v243 = vld [vmem:[#allocation7 + $0x38] sm:$0xff]
    %v244 = vld [vmem:[#allocation7 + $0x40] sm:$0xff]
    %v245 = vld [vmem:[#allocation7 + $0x48] sm:$0xff]
    %v246 = vld [vmem:[#allocation7 + $0x50] sm:$0xff]
    %v247 = vld [vmem:[#allocation7 + $0x58] sm:$0xff]
    %v248 = vld [vmem:[#allocation7 + $0x60] sm:$0xff]
    %v249 = vld [vmem:[#allocation7 + $0x68] sm:$0xff]
    %v250 = vld [vmem:[#allocation7 + $0x70] sm:$0xff]
    %v251 = vld [vmem:[#allocation7 + $0x78] sm:$0xff]
    %v252 = vld [vmem:[#allocation7 + $0x80] sm:$0xff]
    %v253 = vld [vmem:[#allocation7 + $0x88] sm:$0xff]
    %v254 = vld [vmem:[#allocation7 + $0x90] sm:$0xff]
    %v255 = vld [vmem:[#allocation7 + $0x98] sm:$0xff]
    %v256 = vld [vmem:[#allocation7 + $0xa0] sm:$0xff]
    %v257 = vld [vmem:[#allocation7 + $0xa8] sm:$0xff]
    %v258 = vld [vmem:[#allocation7 + $0xb0] sm:$0xff]
    %v259 = vld [vmem:[#allocation7 + $0xb8] sm:$0xff]
    %v260 = vld [vmem:[#allocation7 + $0xc0] sm:$0xff]
    %v261 = vld [vmem:[#allocation7 + $0xc8] sm:$0xff]
    %v262 = vld [vmem:[#allocation7 + $0xd0] sm:$0xff]
    %v263 = vld [vmem:[#allocation7 + $0xd8] sm:$0xff]
    %v264 = vld [vmem:[#allocation7 + $0xe0] sm:$0xff]
    %v265 = vld [vmem:[#allocation7 + $0xe8] sm:$0xff]
    %v266 = vld [vmem:[#allocation7 + $0xf0] sm:$0xff]
    %v267 = vld [vmem:[#allocation7 + $0xf8] sm:$0xff]
    %v268 = vld [vmem:[#allocation7 + $0x100] sm:$0xff]
    %v269 = vld [vmem:[#allocation7 + $0x108] sm:$0xff]
    %v270 = vld [vmem:[#allocation7 + $0x110] sm:$0xff]
    %v271 = vld [vmem:[#allocation7 + $0x118] sm:$0xff]
    %v272 = vld [vmem:[#allocation7 + $0x120] sm:$0xff]
    %v273 = vld [vmem:[#allocation7 + $0x128] sm:$0xff]
    %v274 = vld [vmem:[#allocation7 + $0x130] sm:$0xff]
    %v275 = vld [vmem:[#allocation7 + $0x138] sm:$0xff]
    %v276 = vld [vmem:[#allocation7 + $0x140] sm:$0xff]
    %v277 = vld [vmem:[#allocation7 + $0x148] sm:$0xff]
    %v278 = vld [vmem:[#allocation7 + $0x150] sm:$0xff]
    %v279 = vld [vmem:[#allocation7 + $0x158] sm:$0xff]
    %v280 = vld [vmem:[#allocation7 + $0x160] sm:$0xff]
    %v281 = vld [vmem:[#allocation7 + $0x168] sm:$0xff]
    %v282 = vld [vmem:[#allocation7 + $0x170] sm:$0xff]
    %v283 = vld [vmem:[#allocation7 + $0x178] sm:$0xff]
    %v284 = vld [vmem:[#allocation7 + $0x180] sm:$0xff]
    %v285 = vld [vmem:[#allocation7 + $0x188] sm:$0xff]
    %v286 = vld [vmem:[#allocation7 + $0x190] sm:$0xff]
    %v287 = vld [vmem:[#allocation7 + $0x198] sm:$0xff]
    %v288 = vld [vmem:[#allocation7 + $0x1a0] sm:$0xff]
    %v289 = vld [vmem:[#allocation7 + $0x1a8] sm:$0xff]
    %v290 = vld [vmem:[#allocation7 + $0x1b0] sm:$0xff]
    %v291 = vld [vmem:[#allocation7 + $0x1b8] sm:$0xff]
    %v292 = vld [vmem:[#allocation7 + $0x1c0] sm:$0xff]
    %v293 = vld [vmem:[#allocation7 + $0x1c8] sm:$0xff]
    %v294 = vld [vmem:[#allocation7 + $0x1d0] sm:$0xff]
    %v295 = vld [vmem:[#allocation7 + $0x1d8] sm:$0xff]
    %v296 = vld [vmem:[#allocation7 + $0x1e0] sm:$0xff]
    %v297 = vld [vmem:[#allocation7 + $0x1e8] sm:$0xff]
    %v298 = vld [vmem:[#allocation7 + $0x1f0] sm:$0xff]
    %v299 = vld [vmem:[#allocation7 + $0x1f8] sm:$0xff]
    %v300 = vld [vmem:[%s8] sm:$0x3]
    %v302 = vperm.slane %v300, 0
    %v303 = vperm.slane %v300, 1
    %306 = vmatpush.msra.mxu0 %v266
    %307 = vmatpush.msra.mxu0 %v264
    %308 = vmatpush.msra.mxu0 %v262
    %309 = vmatpush.msra.mxu0 %v260
    %310 = vmatpush.msra.mxu0 %v258
    %311 = vmatpush.msra.mxu0 %v256
    %312 = vmatpush.msra.mxu0 %v254
    %313 = vmatpush.msra.mxu0 %v252
    %314 = vmatpush.msra.mxu0 %v250
    %315 = vmatpush.msra.mxu0 %v248
    %316 = vmatpush.msra.mxu0 %v246
    %317 = vmatpush.msra.mxu0 %v244
    %318 = vmatpush.msra.mxu0 %v242
    %319 = vmatpush.msra.mxu0 %v240
    %320 = vmatpush.msra.mxu0 %v238
    %321 = vmatpush.msra.mxu0 %v236
    %322 = vmatmul.f32.gmra.mxu0 %v232
    %v323 = vpop.f32.mrf.mxu0
    %v324 = vadd.f32 %v302, %v323
    %325 = vmatmul.f32.gmra.mxu0 %v234
    %v326 = vpop.f32.mrf.mxu0
    %v327 = vadd.f32 %v302, %v326
    %328 = vdwg.mxu0
    %329 = vmatpush.msra.mxu0 %v298
    %330 = vmatpush.msra.mxu0 %v296
    %331 = vmatpush.msra.mxu0 %v294
    %332 = vmatpush.msra.mxu0 %v292
    %333 = vmatpush.msra.mxu0 %v290
    %334 = vmatpush.msra.mxu0 %v288
    %335 = vmatpush.msra.mxu0 %v286
    %336 = vmatpush.msra.mxu0 %v284
    %337 = vmatpush.msra.mxu0 %v282
    %338 = vmatpush.msra.mxu0 %v280
    %339 = vmatpush.msra.mxu0 %v278
    %340 = vmatpush.msra.mxu0 %v276
    %341 = vmatpush.msra.mxu0 %v274
    %342 = vmatpush.msra.mxu0 %v272
    %343 = vmatpush.msra.mxu0 %v270
    %344 = vmatpush.msra.mxu0 %v268
    %345 = vmatmul.f32.gmra.mxu0 %v233
    %v346 = vpop.f32.mrf.mxu0
    %v347 = vadd.f32 %v324, %v346
    %348 = vmatmul.f32.gmra.mxu0 %v235
    %v349 = vpop.f32.mrf.mxu0
    %v350 = vadd.f32 %v327, %v349
    %351 = vdwg.mxu0
    %352 = vmatpush.msra.mxu0 %v267
    %353 = vmatpush.msra.mxu0 %v265
    %354 = vmatpush.msra.mxu0 %v263
    %355 = vmatpush.msra.mxu0 %v261
    %356 = vmatpush.msra.mxu0 %v259
    %357 = vmatpush.msra.mxu0 %v257
    %358 = vmatpush.msra.mxu0 %v255
    %359 = vmatpush.msra.mxu0 %v253
    %360 = vmatpush.msra.mxu0 %v251
    %361 = vmatpush.msra.mxu0 %v249
    %362 = vmatpush.msra.mxu0 %v247
    %363 = vmatpush.msra.mxu0 %v245
    %364 = vmatpush.msra.mxu0 %v243
    %365 = vmatpush.msra.mxu0 %v241
    %366 = vmatpush.msra.mxu0 %v239
    %367 = vmatpush.msra.mxu0 %v237
    %368 = vmatmul.f32.gmra.mxu0 %v232
    %v369 = vpop.f32.mrf.mxu0
    %v370 = vadd.f32 %v303, %v369
    %371 = vmatmul.f32.gmra.mxu0 %v234
    %v372 = vpop.f32.mrf.mxu0
    %v373 = vadd.f32 %v303, %v372
    %374 = vdwg.mxu0
    %375 = vmatpush.msra.mxu0 %v299
    %376 = vmatpush.msra.mxu0 %v297
    %377 = vmatpush.msra.mxu0 %v295
    %378 = vmatpush.msra.mxu0 %v293
    %379 = vmatpush.msra.mxu0 %v291
    %380 = vmatpush.msra.mxu0 %v289
    %381 = vmatpush.msra.mxu0 %v287
    %382 = vmatpush.msra.mxu0 %v285
    %383 = vmatpush.msra.mxu0 %v283
    %384 = vmatpush.msra.mxu0 %v281
    %385 = vmatpush.msra.mxu0 %v279
    %386 = vmatpush.msra.mxu0 %v277
    %387 = vmatpush.msra.mxu0 %v275
    %388 = vmatpush.msra.mxu0 %v273
    %389 = vmatpush.msra.mxu0 %v271
    %390 = vmatpush.msra.mxu0 %v269
    %391 = vmatmul.f32.gmra.mxu0 %v233
    %v392 = vpop.f32.mrf.mxu0
    %v393 = vadd.f32 %v370, %v392
    %394 = vmatmul.f32.gmra.mxu0 %v235
    %v395 = vpop.f32.mrf.mxu0
    %v396 = vadd.f32 %v373, %v395
    %397 = vdwg.mxu0
    %v398 = vmax.f32 %v347, 0.0
    %v399 = vmax.f32 %v393, 0.0
    %v400 = vmax.f32 %v350, 0.0
    %v401 = vmax.f32 %v396, 0.0
    %v402 = vld [vmem:[#allocation8] sm:$0xff]
    %v403 = vld [vmem:[#allocation8 + $0x8] sm:$0xff]
    %v404 = vld [vmem:[#allocation8 + $0x10] sm:$0xff]
    %v405 = vld [vmem:[#allocation8 + $0x18] sm:$0xff]
    %v406 = vld [vmem:[#allocation8 + $0x20] sm:$0xff]
    %v407 = vld [vmem:[#allocation8 + $0x28] sm:$0xff]
    %v408 = vld [vmem:[#allocation8 + $0x30] sm:$0xff]
    %v409 = vld [vmem:[#allocation8 + $0x38] sm:$0xff]
    %v410 = vld [vmem:[#allocation8 + $0x40] sm:$0xff]
    %v411 = vld [vmem:[#allocation8 + $0x48] sm:$0xff]
    %v412 = vld [vmem:[#allocation8 + $0x50] sm:$0xff]
    %v413 = vld [vmem:[#allocation8 + $0x58] sm:$0xff]
    %v414 = vld [vmem:[#allocation8 + $0x60] sm:$0xff]
    %v415 = vld [vmem:[#allocation8 + $0x68] sm:$0xff]
    %v416 = vld [vmem:[#allocation8 + $0x70] sm:$0xff]
    %v417 = vld [vmem:[#allocation8 + $0x78] sm:$0xff]
    %v418 = vld [vmem:[#allocation8 + $0x80] sm:$0xff]
    %v419 = vld [vmem:[#allocation8 + $0x88] sm:$0xff]
    %v420 = vld [vmem:[#allocation8 + $0x90] sm:$0xff]
    %v421 = vld [vmem:[#allocation8 + $0x98] sm:$0xff]
    %v422 = vld [vmem:[#allocation8 + $0xa0] sm:$0xff]
    %v423 = vld [vmem:[#allocation8 + $0xa8] sm:$0xff]
    %v424 = vld [vmem:[#allocation8 + $0xb0] sm:$0xff]
    %v425 = vld [vmem:[#allocation8 + $0xb8] sm:$0xff]
    %v426 = vld [vmem:[#allocation8 + $0xc0] sm:$0xff]
    %v427 = vld [vmem:[#allocation8 + $0xc8] sm:$0xff]
    %v428 = vld [vmem:[#allocation8 + $0xd0] sm:$0xff]
    %v429 = vld [vmem:[#allocation8 + $0xd8] sm:$0xff]
    %v430 = vld [vmem:[#allocation8 + $0xe0] sm:$0xff]
    %v431 = vld [vmem:[#allocation8 + $0xe8] sm:$0xff]
    %v432 = vld [vmem:[#allocation8 + $0xf0] sm:$0xff]
    %v433 = vld [vmem:[#allocation8 + $0xf8] sm:$0xff]
    %v434 = vld [vmem:[#allocation8 + $0x100] sm:$0xff]
    %v435 = vld [vmem:[#allocation8 + $0x108] sm:$0xff]
    %v436 = vld [vmem:[#allocation8 + $0x110] sm:$0xff]
    %v437 = vld [vmem:[#allocation8 + $0x118] sm:$0xff]
    %v438 = vld [vmem:[#allocation8 + $0x120] sm:$0xff]
    %v439 = vld [vmem:[#allocation8 + $0x128] sm:$0xff]
    %v440 = vld [vmem:[#allocation8 + $0x130] sm:$0xff]
    %v441 = vld [vmem:[#allocation8 + $0x138] sm:$0xff]
    %v442 = vld [vmem:[#allocation8 + $0x140] sm:$0xff]
    %v443 = vld [vmem:[#allocation8 + $0x148] sm:$0xff]
    %v444 = vld [vmem:[#allocation8 + $0x150] sm:$0xff]
    %v445 = vld [vmem:[#allocation8 + $0x158] sm:$0xff]
    %v446 = vld [vmem:[#allocation8 + $0x160] sm:$0xff]
    %v447 = vld [vmem:[#allocation8 + $0x168] sm:$0xff]
    %v448 = vld [vmem:[#allocation8 + $0x170] sm:$0xff]
    %v449 = vld [vmem:[#allocation8 + $0x178] sm:$0xff]
    %v450 = vld [vmem:[#allocation8 + $0x180] sm:$0xff]
    %v451 = vld [vmem:[#allocation8 + $0x188] sm:$0xff]
    %v452 = vld [vmem:[#allocation8 + $0x190] sm:$0xff]
    %v453 = vld [vmem:[#allocation8 + $0x198] sm:$0xff]
    %v454 = vld [vmem:[#allocation8 + $0x1a0] sm:$0xff]
    %v455 = vld [vmem:[#allocation8 + $0x1a8] sm:$0xff]
    %v456 = vld [vmem:[#allocation8 + $0x1b0] sm:$0xff]
    %v457 = vld [vmem:[#allocation8 + $0x1b8] sm:$0xff]
    %v458 = vld [vmem:[#allocation8 + $0x1c0] sm:$0xff]
    %v459 = vld [vmem:[#allocation8 + $0x1c8] sm:$0xff]
    %v460 = vld [vmem:[#allocation8 + $0x1d0] sm:$0xff]
    %v461 = vld [vmem:[#allocation8 + $0x1d8] sm:$0xff]
    %v462 = vld [vmem:[#allocation8 + $0x1e0] sm:$0xff]
    %v463 = vld [vmem:[#allocation8 + $0x1e8] sm:$0xff]
    %v464 = vld [vmem:[#allocation8 + $0x1f0] sm:$0xff]
    %v465 = vld [vmem:[#allocation8 + $0x1f8] sm:$0xff]
    %v466 = vld [vmem:[#allocation10] sm:$0xff]
    %v467 = vld [vmem:[#allocation10 + $0x8] sm:$0xff]
    %v468 = vld [vmem:[#allocation10 + $0x10] sm:$0xff]
    %v469 = vld [vmem:[#allocation10 + $0x18] sm:$0xff]
    %v470 = vld [vmem:[#allocation10 + $0x20] sm:$0xff]
    %v471 = vld [vmem:[#allocation10 + $0x28] sm:$0xff]
    %v472 = vld [vmem:[#allocation10 + $0x30] sm:$0xff]
    %v473 = vld [vmem:[#allocation10 + $0x38] sm:$0xff]
    %v474 = vld [vmem:[#allocation10 + $0x40] sm:$0xff]
    %v475 = vld [vmem:[#allocation10 + $0x48] sm:$0xff]
    %v476 = vld [vmem:[#allocation10 + $0x50] sm:$0xff]
    %v477 = vld [vmem:[#allocation10 + $0x58] sm:$0xff]
    %v478 = vld [vmem:[#allocation10 + $0x60] sm:$0xff]
    %v479 = vld [vmem:[#allocation10 + $0x68] sm:$0xff]
    %v480 = vld [vmem:[#allocation10 + $0x70] sm:$0xff]
    %v481 = vld [vmem:[#allocation10 + $0x78] sm:$0xff]
    %v482 = vld [vmem:[#allocation10 + $0x80] sm:$0xff]
    %v483 = vld [vmem:[#allocation10 + $0x88] sm:$0xff]
    %v484 = vld [vmem:[#allocation10 + $0x90] sm:$0xff]
    %v485 = vld [vmem:[#allocation10 + $0x98] sm:$0xff]
    %v486 = vld [vmem:[#allocation10 + $0xa0] sm:$0xff]
    %v487 = vld [vmem:[#allocation10 + $0xa8] sm:$0xff]
    %v488 = vld [vmem:[#allocation10 + $0xb0] sm:$0xff]
    %v489 = vld [vmem:[#allocation10 + $0xb8] sm:$0xff]
    %v490 = vld [vmem:[#allocation10 + $0xc0] sm:$0xff]
    %v491 = vld [vmem:[#allocation10 + $0xc8] sm:$0xff]
    %v492 = vld [vmem:[#allocation10 + $0xd0] sm:$0xff]
    %v493 = vld [vmem:[#allocation10 + $0xd8] sm:$0xff]
    %v494 = vld [vmem:[#allocation10 + $0xe0] sm:$0xff]
    %v495 = vld [vmem:[#allocation10 + $0xe8] sm:$0xff]
    %v496 = vld [vmem:[#allocation10 + $0xf0] sm:$0xff]
    %v497 = vld [vmem:[#allocation10 + $0xf8] sm:$0xff]
    %v498 = vld [vmem:[#allocation10 + $0x100] sm:$0xff]
    %v499 = vld [vmem:[#allocation10 + $0x108] sm:$0xff]
    %v500 = vld [vmem:[#allocation10 + $0x110] sm:$0xff]
    %v501 = vld [vmem:[#allocation10 + $0x118] sm:$0xff]
    %v502 = vld [vmem:[#allocation10 + $0x120] sm:$0xff]
    %v503 = vld [vmem:[#allocation10 + $0x128] sm:$0xff]
    %v504 = vld [vmem:[#allocation10 + $0x130] sm:$0xff]
    %v505 = vld [vmem:[#allocation10 + $0x138] sm:$0xff]
    %v506 = vld [vmem:[#allocation10 + $0x140] sm:$0xff]
    %v507 = vld [vmem:[#allocation10 + $0x148] sm:$0xff]
    %v508 = vld [vmem:[#allocation10 + $0x150] sm:$0xff]
    %v509 = vld [vmem:[#allocation10 + $0x158] sm:$0xff]
    %v510 = vld [vmem:[#allocation10 + $0x160] sm:$0xff]
    %v511 = vld [vmem:[#allocation10 + $0x168] sm:$0xff]
    %v512 = vld [vmem:[#allocation10 + $0x170] sm:$0xff]
    %v513 = vld [vmem:[#allocation10 + $0x178] sm:$0xff]
    %v514 = vld [vmem:[#allocation10 + $0x180] sm:$0xff]
    %v515 = vld [vmem:[#allocation10 + $0x188] sm:$0xff]
    %v516 = vld [vmem:[#allocation10 + $0x190] sm:$0xff]
    %v517 = vld [vmem:[#allocation10 + $0x198] sm:$0xff]
    %v518 = vld [vmem:[#allocation10 + $0x1a0] sm:$0xff]
    %v519 = vld [vmem:[#allocation10 + $0x1a8] sm:$0xff]
    %v520 = vld [vmem:[#allocation10 + $0x1b0] sm:$0xff]
    %v521 = vld [vmem:[#allocation10 + $0x1b8] sm:$0xff]
    %v522 = vld [vmem:[#allocation10 + $0x1c0] sm:$0xff]
    %v523 = vld [vmem:[#allocation10 + $0x1c8] sm:$0xff]
    %v524 = vld [vmem:[#allocation10 + $0x1d0] sm:$0xff]
    %v525 = vld [vmem:[#allocation10 + $0x1d8] sm:$0xff]
    %v526 = vld [vmem:[#allocation10 + $0x1e0] sm:$0xff]
    %v527 = vld [vmem:[#allocation10 + $0x1e8] sm:$0xff]
    %v528 = vld [vmem:[#allocation10 + $0x1f0] sm:$0xff]
    %v529 = vld [vmem:[#allocation10 + $0x1f8] sm:$0xff]
    %530 = vmatpush.msra.mxu0 %v496
    %531 = vmatpush.msra.mxu0 %v494
    %532 = vmatpush.msra.mxu0 %v492
    %533 = vmatpush.msra.mxu0 %v490
    %534 = vmatpush.msra.mxu0 %v488
    %535 = vmatpush.msra.mxu0 %v486
    %536 = vmatpush.msra.mxu0 %v484
    %537 = vmatpush.msra.mxu0 %v482
    %538 = vmatpush.msra.mxu0 %v480
    %539 = vmatpush.msra.mxu0 %v478
    %540 = vmatpush.msra.mxu0 %v476
    %541 = vmatpush.msra.mxu0 %v474
    %542 = vmatpush.msra.mxu0 %v472
    %543 = vmatpush.msra.mxu0 %v470
    %544 = vmatpush.msra.mxu0 %v468
    %545 = vmatpush.msra.mxu0 %v466
    %546 = vmatmul.f32.gmra.mxu0 %v398
    %v547 = vpop.f32.mrf.mxu0
    %v548 = vadd.f32 0.0, %v547
    %549 = vmatmul.f32.gmra.mxu0 %v400
    %v550 = vpop.f32.mrf.mxu0
    %v551 = vadd.f32 0.0, %v550
    %552 = vdwg.mxu0
    %553 = vmatpush.msra.mxu0 %v528
    %554 = vmatpush.msra.mxu0 %v526
    %555 = vmatpush.msra.mxu0 %v524
    %556 = vmatpush.msra.mxu0 %v522
    %557 = vmatpush.msra.mxu0 %v520
    %558 = vmatpush.msra.mxu0 %v518
    %559 = vmatpush.msra.mxu0 %v516
    %560 = vmatpush.msra.mxu0 %v514
    %561 = vmatpush.msra.mxu0 %v512
    %562 = vmatpush.msra.mxu0 %v510
    %563 = vmatpush.msra.mxu0 %v508
    %564 = vmatpush.msra.mxu0 %v506
    %565 = vmatpush.msra.mxu0 %v504
    %566 = vmatpush.msra.mxu0 %v502
    %567 = vmatpush.msra.mxu0 %v500
    %568 = vmatpush.msra.mxu0 %v498
    %569 = vmatmul.f32.gmra.mxu0 %v399
    %v570 = vpop.f32.mrf.mxu0
    %v571 = vadd.f32 %v548, %v570
    %572 = vmatmul.f32.gmra.mxu0 %v401
    %v573 = vpop.f32.mrf.mxu0
    %v574 = vadd.f32 %v551, %v573
    %575 = vdwg.mxu0
    %576 = vmatpush.msra.mxu0 %v497
    %577 = vmatpush.msra.mxu0 %v495
    %578 = vmatpush.msra.mxu0 %v493
    %579 = vmatpush.msra.mxu0 %v491
    %580 = vmatpush.msra.mxu0 %v489
    %581 = vmatpush.msra.mxu0 %v487
    %582 = vmatpush.msra.mxu0 %v485
    %583 = vmatpush.msra.mxu0 %v483
    %584 = vmatpush.msra.mxu0 %v481
    %585 = vmatpush.msra.mxu0 %v479
    %586 = vmatpush.msra.mxu0 %v477
    %587 = vmatpush.msra.mxu0 %v475
    %588 = vmatpush.msra.mxu0 %v473
    %589 = vmatpush.msra.mxu0 %v471
    %590 = vmatpush.msra.mxu0 %v469
    %591 = vmatpush.msra.mxu0 %v467
    %592 = vmatmul.f32.gmra.mxu0 %v398
    %v593 = vpop.f32.mrf.mxu0
    %v594 = vadd.f32 0.0, %v593
    %595 = vmatmul.f32.gmra.mxu0 %v400
    %v596 = vpop.f32.mrf.mxu0
    %v597 = vadd.f32 0.0, %v596
    %598 = vdwg.mxu0
    %599 = vmatpush.msra.mxu0 %v529
    %600 = vmatpush.msra.mxu0 %v527
    %601 = vmatpush.msra.mxu0 %v525
    %602 = vmatpush.msra.mxu0 %v523
    %603 = vmatpush.msra.mxu0 %v521
    %604 = vmatpush.msra.mxu0 %v519
    %605 = vmatpush.msra.mxu0 %v517
    %606 = vmatpush.msra.mxu0 %v515
    %607 = vmatpush.msra.mxu0 %v513
    %608 = vmatpush.msra.mxu0 %v511
    %609 = vmatpush.msra.mxu0 %v509
    %610 = vmatpush.msra.mxu0 %v507
    %611 = vmatpush.msra.mxu0 %v505
    %612 = vmatpush.msra.mxu0 %v503
    %613 = vmatpush.msra.mxu0 %v501
    %614 = vmatpush.msra.mxu0 %v499
    %615 = vmatmul.f32.gmra.mxu0 %v399
    %v616 = vpop.f32.mrf.mxu0
    %v617 = vadd.f32 %v594, %v616
    %618 = vmatmul.f32.gmra.mxu0 %v401
    %v619 = vpop.f32.mrf.mxu0
    %v620 = vadd.f32 %v597, %v619
    %621 = vdwg.mxu0
    %622 = vmatpush.msra.mxu0 %v432
    %623 = vmatpush.msra.mxu0 %v430
    %624 = vmatpush.msra.mxu0 %v428
    %625 = vmatpush.msra.mxu0 %v426
    %626 = vmatpush.msra.mxu0 %v424
    %627 = vmatpush.msra.mxu0 %v422
    %628 = vmatpush.msra.mxu0 %v420
    %629 = vmatpush.msra.mxu0 %v418
    %630 = vmatpush.msra.mxu0 %v416
    %631 = vmatpush.msra.mxu0 %v414
    %632 = vmatpush.msra.mxu0 %v412
    %633 = vmatpush.msra.mxu0 %v410
    %634 = vmatpush.msra.mxu0 %v408
    %635 = vmatpush.msra.mxu0 %v406
    %636 = vmatpush.msra.mxu0 %v404
    %637 = vmatpush.msra.mxu0 %v402
    %638 = vmatmul.f32.gmra.mxu0 %v228
    %v639 = vpop.f32.mrf.mxu0
    %v640 = vadd.f32 %v571, %v639
    %641 = vmatmul.f32.gmra.mxu0 %v230
    %v642 = vpop.f32.mrf.mxu0
    %v643 = vadd.f32 %v574, %v642
    %644 = vdwg.mxu0
    %645 = vmatpush.msra.mxu0 %v464
    %646 = vmatpush.msra.mxu0 %v462
    %647 = vmatpush.msra.mxu0 %v460
    %648 = vmatpush.msra.mxu0 %v458
    %649 = vmatpush.msra.mxu0 %v456
    %650 = vmatpush.msra.mxu0 %v454
    %651 = vmatpush.msra.mxu0 %v452
    %652 = vmatpush.msra.mxu0 %v450
    %653 = vmatpush.msra.mxu0 %v448
    %654 = vmatpush.msra.mxu0 %v446
    %655 = vmatpush.msra.mxu0 %v444
    %656 = vmatpush.msra.mxu0 %v442
    %657 = vmatpush.msra.mxu0 %v440
    %658 = vmatpush.msra.mxu0 %v438
    %659 = vmatpush.msra.mxu0 %v436
    %660 = vmatpush.msra.mxu0 %v434
    %661 = vmatmul.f32.gmra.mxu0 %v229
    %v662 = vpop.f32.mrf.mxu0
    %v663 = vadd.f32 %v640, %v662
    %664 = vmatmul.f32.gmra.mxu0 %v231
    %v665 = vpop.f32.mrf.mxu0
    %v666 = vadd.f32 %v643, %v665
    %667 = vdwg.mxu0
    %668 = vmatpush.msra.mxu0 %v433
    %669 = vmatpush.msra.mxu0 %v431
    %670 = vmatpush.msra.mxu0 %v429
    %671 = vmatpush.msra.mxu0 %v427
    %672 = vmatpush.msra.mxu0 %v425
    %673 = vmatpush.msra.mxu0 %v423
    %674 = vmatpush.msra.mxu0 %v421
    %675 = vmatpush.msra.mxu0 %v419
    %676 = vmatpush.msra.mxu0 %v417
    %677 = vmatpush.msra.mxu0 %v415
    %678 = vmatpush.msra.mxu0 %v413
    %679 = vmatpush.msra.mxu0 %v411
    %680 = vmatpush.msra.mxu0 %v409
    %681 = vmatpush.msra.mxu0 %v407
    %682 = vmatpush.msra.mxu0 %v405
    %683 = vmatpush.msra.mxu0 %v403
    %684 = vmatmul.f32.gmra.mxu0 %v228
    %v685 = vpop.f32.mrf.mxu0
    %v686 = vadd.f32 %v617, %v685
    %687 = vmatmul.f32.gmra.mxu0 %v230
    %v688 = vpop.f32.mrf.mxu0
    %v689 = vadd.f32 %v620, %v688
    %690 = vdwg.mxu0
    %691 = vmatpush.msra.mxu0 %v465
    %692 = vmatpush.msra.mxu0 %v463
    %693 = vmatpush.msra.mxu0 %v461
    %694 = vmatpush.msra.mxu0 %v459
    %695 = vmatpush.msra.mxu0 %v457
    %696 = vmatpush.msra.mxu0 %v455
    %697 = vmatpush.msra.mxu0 %v453
    %698 = vmatpush.msra.mxu0 %v451
    %699 = vmatpush.msra.mxu0 %v449
    %700 = vmatpush.msra.mxu0 %v447
    %701 = vmatpush.msra.mxu0 %v445
    %702 = vmatpush.msra.mxu0 %v443
    %703 = vmatpush.msra.mxu0 %v441
    %704 = vmatpush.msra.mxu0 %v439
    %705 = vmatpush.msra.mxu0 %v437
    %706 = vmatpush.msra.mxu0 %v435
    %707 = vmatmul.f32.gmra.mxu0 %v229
    %v708 = vpop.f32.mrf.mxu0
    %v709 = vadd.f32 %v686, %v708
    %710 = vmatmul.f32.gmra.mxu0 %v231
    %v711 = vpop.f32.mrf.mxu0
    %v712 = vadd.f32 %v689, %v711
    %713 = vdwg.mxu0
    %v714 = vld [vmem:[%s11] sm:$0x3]
    %v716 = vperm.slane %v714, 0
    %v717 = vperm.slane %v714, 1
    %v720 = vadd.f32 %v663, %v716
    %v721 = vadd.f32 %v709, %v717
    %v722 = vadd.f32 %v666, %v716
    %v723 = vadd.f32 %v712, %v717
    %v724 = vld [vmem:[#allocation2] sm:$0xff]
    %v725 = vld [vmem:[#allocation2 + $0x8] sm:$0xff]
    %v726 = vld [vmem:[#allocation2 + $0x10] sm:$0xff]
    %v727 = vld [vmem:[#allocation2 + $0x18] sm:$0xff]
    %v728 = vld [vmem:[#allocation2 + $0x20] sm:$0xff]
    %v729 = vld [vmem:[#allocation2 + $0x28] sm:$0xff]
    %v730 = vld [vmem:[#allocation2 + $0x30] sm:$0xff]
    %v731 = vld [vmem:[#allocation2 + $0x38] sm:$0xff]
    %v732 = vld [vmem:[#allocation2 + $0x40] sm:$0xff]
    %v733 = vld [vmem:[#allocation2 + $0x48] sm:$0xff]
    %v734 = vld [vmem:[#allocation2 + $0x50] sm:$0xff]
    %v735 = vld [vmem:[#allocation2 + $0x58] sm:$0xff]
    %v736 = vld [vmem:[#allocation2 + $0x60] sm:$0xff]
    %v737 = vld [vmem:[#allocation2 + $0x68] sm:$0xff]
    %v738 = vld [vmem:[#allocation2 + $0x70] sm:$0xff]
    %v739 = vld [vmem:[#allocation2 + $0x78] sm:$0xff]
    %v740 = vld [vmem:[#allocation2 + $0x80] sm:$0xff]
    %v741 = vld [vmem:[#allocation2 + $0x88] sm:$0xff]
    %v742 = vld [vmem:[#allocation2 + $0x90] sm:$0xff]
    %v743 = vld [vmem:[#allocation2 + $0x98] sm:$0xff]
    %v744 = vld [vmem:[#allocation2 + $0xa0] sm:$0xff]
    %v745 = vld [vmem:[#allocation2 + $0xa8] sm:$0xff]
    %v746 = vld [vmem:[#allocation2 + $0xb0] sm:$0xff]
    %v747 = vld [vmem:[#allocation2 + $0xb8] sm:$0xff]
    %v748 = vld [vmem:[#allocation2 + $0xc0] sm:$0xff]
    %v749 = vld [vmem:[#allocation2 + $0xc8] sm:$0xff]
    %v750 = vld [vmem:[#allocation2 + $0xd0] sm:$0xff]
    %v751 = vld [vmem:[#allocation2 + $0xd8] sm:$0xff]
    %v752 = vld [vmem:[#allocation2 + $0xe0] sm:$0xff]
    %v753 = vld [vmem:[#allocation2 + $0xe8] sm:$0xff]
    %v754 = vld [vmem:[#allocation2 + $0xf0] sm:$0xff]
    %v755 = vld [vmem:[#allocation2 + $0xf8] sm:$0xff]
    %v756 = vld [vmem:[#allocation11] sm:$0xff]
    %v757 = vld [vmem:[#allocation11 + $0x8] sm:$0xff]
    %v758 = vld [vmem:[#allocation11 + $0x10] sm:$0xff]
    %v759 = vld [vmem:[#allocation11 + $0x18] sm:$0xff]
    %v760 = vld [vmem:[#allocation11 + $0x20] sm:$0xff]
    %v761 = vld [vmem:[#allocation11 + $0x28] sm:$0xff]
    %v762 = vld [vmem:[#allocation11 + $0x30] sm:$0xff]
    %v763 = vld [vmem:[#allocation11 + $0x38] sm:$0xff]
    %v764 = vld [vmem:[#allocation11 + $0x40] sm:$0xff]
    %v765 = vld [vmem:[#allocation11 + $0x48] sm:$0xff]
    %v766 = vld [vmem:[#allocation11 + $0x50] sm:$0xff]
    %v767 = vld [vmem:[#allocation11 + $0x58] sm:$0xff]
    %v768 = vld [vmem:[#allocation11 + $0x60] sm:$0xff]
    %v769 = vld [vmem:[#allocation11 + $0x68] sm:$0xff]
    %v770 = vld [vmem:[#allocation11 + $0x70] sm:$0xff]
    %v771 = vld [vmem:[#allocation11 + $0x78] sm:$0xff]
    %v772 = vld [vmem:[#allocation11 + $0x80] sm:$0xff]
    %v773 = vld [vmem:[#allocation11 + $0x88] sm:$0xff]
    %v774 = vld [vmem:[#allocation11 + $0x90] sm:$0xff]
    %v775 = vld [vmem:[#allocation11 + $0x98] sm:$0xff]
    %v776 = vld [vmem:[#allocation11 + $0xa0] sm:$0xff]
    %v777 = vld [vmem:[#allocation11 + $0xa8] sm:$0xff]
    %v778 = vld [vmem:[#allocation11 + $0xb0] sm:$0xff]
    %v779 = vld [vmem:[#allocation11 + $0xb8] sm:$0xff]
    %v780 = vld [vmem:[#allocation11 + $0xc0] sm:$0xff]
    %v781 = vld [vmem:[#allocation11 + $0xc8] sm:$0xff]
    %v782 = vld [vmem:[#allocation11 + $0xd0] sm:$0xff]
    %v783 = vld [vmem:[#allocation11 + $0xd8] sm:$0xff]
    %v784 = vld [vmem:[#allocation11 + $0xe0] sm:$0xff]
    %v785 = vld [vmem:[#allocation11 + $0xe8] sm:$0xff]
    %v786 = vld [vmem:[#allocation11 + $0xf0] sm:$0xff]
    %v787 = vld [vmem:[#allocation11 + $0xf8] sm:$0xff]
    %788 = vmatpush.msra.mxu0 %v771
    %789 = vmatpush.msra.mxu0 %v770
    %790 = vmatpush.msra.mxu0 %v769
    %791 = vmatpush.msra.mxu0 %v768
    %792 = vmatpush.msra.mxu0 %v767
    %793 = vmatpush.msra.mxu0 %v766
    %794 = vmatpush.msra.mxu0 %v765
    %795 = vmatpush.msra.mxu0 %v764
    %796 = vmatpush.msra.mxu0 %v763
    %797 = vmatpush.msra.mxu0 %v762
    %798 = vmatpush.msra.mxu0 %v761
    %799 = vmatpush.msra.mxu0 %v760
    %800 = vmatpush.msra.mxu0 %v759
    %801 = vmatpush.msra.mxu0 %v758
    %802 = vmatpush.msra.mxu0 %v757
    %803 = vmatpush.msra.mxu0 %v756
    %804 = vmatmul.f32.gmra.mxu0 %v724
    %v805 = vpop.f32.mrf.mxu0
    %v806 = vadd.f32 0.0, %v805
    %807 = vmatmul.f32.gmra.mxu0 %v726
    %v808 = vpop.f32.mrf.mxu0
    %v809 = vadd.f32 0.0, %v808
    %810 = vmatmul.f32.gmra.mxu0 %v728
    %v811 = vpop.f32.mrf.mxu0
    %v812 = vadd.f32 0.0, %v811
    %813 = vmatmul.f32.gmra.mxu0 %v730
    %v814 = vpop.f32.mrf.mxu0
    %v815 = vadd.f32 0.0, %v814
    %816 = vmatmul.f32.gmra.mxu0 %v732
    %v817 = vpop.f32.mrf.mxu0
    %v818 = vadd.f32 0.0, %v817
    %819 = vmatmul.f32.gmra.mxu0 %v734
    %v820 = vpop.f32.mrf.mxu0
    %v821 = vadd.f32 0.0, %v820
    %822 = vmatmul.f32.gmra.mxu0 %v736
    %v823 = vpop.f32.mrf.mxu0
    %v824 = vadd.f32 0.0, %v823
    %825 = vmatmul.f32.gmra.mxu0 %v738
    %v826 = vpop.f32.mrf.mxu0
    %v827 = vadd.f32 0.0, %v826
    %828 = vmatmul.f32.gmra.mxu0 %v740
    %v829 = vpop.f32.mrf.mxu0
    %v830 = vadd.f32 0.0, %v829
    %831 = vmatmul.f32.gmra.mxu0 %v742
    %v832 = vpop.f32.mrf.mxu0
    %v833 = vadd.f32 0.0, %v832
    %834 = vmatmul.f32.gmra.mxu0 %v744
    %v835 = vpop.f32.mrf.mxu0
    %v836 = vadd.f32 0.0, %v835
    %837 = vmatmul.f32.gmra.mxu0 %v746
    %v838 = vpop.f32.mrf.mxu0
    %v839 = vadd.f32 0.0, %v838
    %840 = vmatmul.f32.gmra.mxu0 %v748
    %v841 = vpop.f32.mrf.mxu0
    %v842 = vadd.f32 0.0, %v841
    %843 = vmatmul.f32.gmra.mxu0 %v750
    %v844 = vpop.f32.mrf.mxu0
    %v845 = vadd.f32 0.0, %v844
    %846 = vmatmul.f32.gmra.mxu0 %v752
    %v847 = vpop.f32.mrf.mxu0
    %v848 = vadd.f32 0.0, %v847
    %849 = vmatmul.f32.gmra.mxu0 %v754
    %v850 = vpop.f32.mrf.mxu0
    %v851 = vadd.f32 0.0, %v850
    %852 = vdwg.mxu0
    %853 = vmatpush.msra.mxu0 %v787
    %854 = vmatpush.msra.mxu0 %v786
    %855 = vmatpush.msra.mxu0 %v785
    %856 = vmatpush.msra.mxu0 %v784
    %857 = vmatpush.msra.mxu0 %v783
    %858 = vmatpush.msra.mxu0 %v782
    %859 = vmatpush.msra.mxu0 %v781
    %860 = vmatpush.msra.mxu0 %v780
    %861 = vmatpush.msra.mxu0 %v779
    %862 = vmatpush.msra.mxu0 %v778
    %863 = vmatpush.msra.mxu0 %v777
    %864 = vmatpush.msra.mxu0 %v776
    %865 = vmatpush.msra.mxu0 %v775
    %866 = vmatpush.msra.mxu0 %v774
    %867 = vmatpush.msra.mxu0 %v773
    %868 = vmatpush.msra.mxu0 %v772
    %869 = vmatmul.f32.gmra.mxu0 %v725
    %v870 = vpop.f32.mrf.mxu0
    %v871 = vadd.f32 %v806, %v870
    %872 = vmatmul.f32.gmra.mxu0 %v727
    %v873 = vpop.f32.mrf.mxu0
    %v874 = vadd.f32 %v809, %v873
    %875 = vmatmul.f32.gmra.mxu0 %v729
    %v876 = vpop.f32.mrf.mxu0
    %v877 = vadd.f32 %v812, %v876
    %878 = vmatmul.f32.gmra.mxu0 %v731
    %v879 = vpop.f32.mrf.mxu0
    %v880 = vadd.f32 %v815, %v879
    %881 = vmatmul.f32.gmra.mxu0 %v733
    %v882 = vpop.f32.mrf.mxu0
    %v883 = vadd.f32 %v818, %v882
    %884 = vmatmul.f32.gmra.mxu0 %v735
    %v885 = vpop.f32.mrf.mxu0
    %v886 = vadd.f32 %v821, %v885
    %887 = vmatmul.f32.gmra.mxu0 %v737
    %v888 = vpop.f32.mrf.mxu0
    %v889 = vadd.f32 %v824, %v888
    %890 = vmatmul.f32.gmra.mxu0 %v739
    %v891 = vpop.f32.mrf.mxu0
    %v892 = vadd.f32 %v827, %v891
    %893 = vmatmul.f32.gmra.mxu0 %v741
    %v894 = vpop.f32.mrf.mxu0
    %v895 = vadd.f32 %v830, %v894
    %896 = vmatmul.f32.gmra.mxu0 %v743
    %v897 = vpop.f32.mrf.mxu0
    %v898 = vadd.f32 %v833, %v897
    %899 = vmatmul.f32.gmra.mxu0 %v745
    %v900 = vpop.f32.mrf.mxu0
    %v901 = vadd.f32 %v836, %v900
    %902 = vmatmul.f32.gmra.mxu0 %v747
    %v903 = vpop.f32.mrf.mxu0
    %v904 = vadd.f32 %v839, %v903
    %905 = vmatmul.f32.gmra.mxu0 %v749
    %v906 = vpop.f32.mrf.mxu0
    %v907 = vadd.f32 %v842, %v906
    %908 = vmatmul.f32.gmra.mxu0 %v751
    %v909 = vpop.f32.mrf.mxu0
    %v910 = vadd.f32 %v845, %v909
    %911 = vmatmul.f32.gmra.mxu0 %v753
    %v912 = vpop.f32.mrf.mxu0
    %v913 = vadd.f32 %v848, %v912
    %914 = vmatmul.f32.gmra.mxu0 %v755
    %v915 = vpop.f32.mrf.mxu0
    %v916 = vadd.f32 %v851, %v915
    %917 = vdwg.mxu0
    %918 = vmatpush.msra.mxu0 %v771
    %919 = vmatpush.msra.mxu0 %v770
    %920 = vmatpush.msra.mxu0 %v769
    %921 = vmatpush.msra.mxu0 %v768
    %922 = vmatpush.msra.mxu0 %v767
    %923 = vmatpush.msra.mxu0 %v766
    %924 = vmatpush.msra.mxu0 %v765
    %925 = vmatpush.msra.mxu0 %v764
    %926 = vmatpush.msra.mxu0 %v763
    %927 = vmatpush.msra.mxu0 %v762
    %928 = vmatpush.msra.mxu0 %v761
    %929 = vmatpush.msra.mxu0 %v760
    %930 = vmatpush.msra.mxu0 %v759
    %931 = vmatpush.msra.mxu0 %v758
    %932 = vmatpush.msra.mxu0 %v757
    %933 = vmatpush.msra.mxu0 %v756
    %934 = vmatmul.f32.gmra.mxu0 %v720
    %v935 = vpop.f32.mrf.mxu0
    %v936 = vadd.f32 0.0, %v935
    %937 = vmatmul.f32.gmra.mxu0 %v722
    %v938 = vpop.f32.mrf.mxu0
    %v939 = vadd.f32 0.0, %v938
    %940 = vdwg.mxu0
    %941 = vmatpush.msra.mxu0 %v787
    %942 = vmatpush.msra.mxu0 %v786
    %943 = vmatpush.msra.mxu0 %v785
    %944 = vmatpush.msra.mxu0 %v784
    %945 = vmatpush.msra.mxu0 %v783
    %946 = vmatpush.msra.mxu0 %v782
    %947 = vmatpush.msra.mxu0 %v781
    %948 = vmatpush.msra.mxu0 %v780
    %949 = vmatpush.msra.mxu0 %v779
    %950 = vmatpush.msra.mxu0 %v778
    %951 = vmatpush.msra.mxu0 %v777
    %952 = vmatpush.msra.mxu0 %v776
    %953 = vmatpush.msra.mxu0 %v775
    %954 = vmatpush.msra.mxu0 %v774
    %955 = vmatpush.msra.mxu0 %v773
    %956 = vmatpush.msra.mxu0 %v772
    %957 = vmatmul.f32.gmra.mxu0 %v721
    %v958 = vpop.f32.mrf.mxu0
    %v959 = vadd.f32 %v936, %v958
    %960 = vmatmul.f32.gmra.mxu0 %v723
    %v961 = vpop.f32.mrf.mxu0
    %v962 = vadd.f32 %v939, %v961
    %963 = vdwg.mxu0
    %v964 = vld [vmem:[%s3] sm:$0xff]
    %v965 = vld [vmem:[%s3 + $0x8] sm:$0xff]
    %v966 = vld [vmem:[%s3 + $0x10] sm:$0xff]
    %v967 = vld [vmem:[%s3 + $0x18] sm:$0xff]
    %v968 = vld [vmem:[%s3 + $0x20] sm:$0xff]
    %v969 = vld [vmem:[%s3 + $0x28] sm:$0xff]
    %v970 = vld [vmem:[%s3 + $0x30] sm:$0xff]
    %v971 = vld [vmem:[%s3 + $0x38] sm:$0xff]
    %v972 = vld [vmem:[%s3 + $0x40] sm:$0xff]
    %v973 = vld [vmem:[%s3 + $0x48] sm:$0xff]
    %v974 = vld [vmem:[%s3 + $0x50] sm:$0xff]
    %v975 = vld [vmem:[%s3 + $0x58] sm:$0xff]
    %v976 = vld [vmem:[%s3 + $0x60] sm:$0xff]
    %v977 = vld [vmem:[%s3 + $0x68] sm:$0xff]
    %v978 = vld [vmem:[%s3 + $0x70] sm:$0xff]
    %v979 = vld [vmem:[%s3 + $0x78] sm:$0xff]
    %v980 = vld [vmem:[%s13] sm:$0x7]
    %982 = vset.pattern.permute.xlu0 0
    %983 = vperm.xlu0 %982, %v964
    %v984 = vpop.permute.xlu0 %983
    %987 = vset.pattern.permute.xlu0 0
    %988 = vperm.xlu0 %987, %v965
    %v989 = vpop.permute.xlu0 %988
    %992 = vset.pattern.permute.xlu0 0
    %993 = vperm.xlu0 %992, %v966
    %v994 = vpop.permute.xlu0 %993
    %997 = vset.pattern.permute.xlu0 0
    %998 = vperm.xlu0 %997, %v967
    %v999 = vpop.permute.xlu0 %998
    %1002 = vset.pattern.permute.xlu0 0
    %1003 = vperm.xlu0 %1002, %v968
    %v1004 = vpop.permute.xlu0 %1003
    %1007 = vset.pattern.permute.xlu0 0
    %1008 = vperm.xlu0 %1007, %v969
    %v1009 = vpop.permute.xlu0 %1008
    %1012 = vset.pattern.permute.xlu0 0
    %1013 = vperm.xlu0 %1012, %v970
    %v1014 = vpop.permute.xlu0 %1013
    %1017 = vset.pattern.permute.xlu0 0
    %1018 = vperm.xlu0 %1017, %v971
    %v1019 = vpop.permute.xlu0 %1018
    %1022 = vset.pattern.permute.xlu0 0
    %1023 = vperm.xlu0 %1022, %v972
    %v1024 = vpop.permute.xlu0 %1023
    %1027 = vset.pattern.permute.xlu0 0
    %1028 = vperm.xlu0 %1027, %v973
    %v1029 = vpop.permute.xlu0 %1028
    %1032 = vset.pattern.permute.xlu0 0
    %1033 = vperm.xlu0 %1032, %v974
    %v1034 = vpop.permute.xlu0 %1033
    %1037 = vset.pattern.permute.xlu0 0
    %1038 = vperm.xlu0 %1037, %v975
    %v1039 = vpop.permute.xlu0 %1038
    %1042 = vset.pattern.permute.xlu0 0
    %1043 = vperm.xlu0 %1042, %v976
    %v1044 = vpop.permute.xlu0 %1043
    %1047 = vset.pattern.permute.xlu0 0
    %1048 = vperm.xlu0 %1047, %v977
    %v1049 = vpop.permute.xlu0 %1048
    %1052 = vset.pattern.permute.xlu0 0
    %1053 = vperm.xlu0 %1052, %v978
    %v1054 = vpop.permute.xlu0 %1053
    %1057 = vset.pattern.permute.xlu0 0
    %1058 = vperm.xlu0 %1057, %v979
    %v1059 = vpop.permute.xlu0 %1058
    %v1061 = vperm.slane %v980, 0
    %v1062 = vmul.f32 %v984, %v1061
    %v1063 = vmul.f32 %v989, %v1061
    %v1064 = vmul.f32 %v994, %v1061
    %v1065 = vmul.f32 %v999, %v1061
    %v1066 = vmul.f32 %v1004, %v1061
    %v1067 = vmul.f32 %v1009, %v1061
    %v1068 = vmul.f32 %v1014, %v1061
    %v1069 = vmul.f32 %v1019, %v1061
    %v1070 = vmul.f32 %v1024, %v1061
    %v1071 = vmul.f32 %v1029, %v1061
    %v1072 = vmul.f32 %v1034, %v1061
    %v1073 = vmul.f32 %v1039, %v1061
    %v1074 = vmul.f32 %v1044, %v1061
    %v1075 = vmul.f32 %v1049, %v1061
    %v1076 = vmul.f32 %v1054, %v1061
    %v1077 = vmul.f32 %v1059, %v1061
    %1078 = vset.pattern.permute.xlu0 1
    %1079 = vperm.xlu0 %1078, %v964
    %v1080 = vpop.permute.xlu0 %1079
    %1082 = vset.pattern.permute.xlu0 1
    %1083 = vperm.xlu0 %1082, %v965
    %v1084 = vpop.permute.xlu0 %1083
    %1086 = vset.pattern.permute.xlu0 1
    %1087 = vperm.xlu0 %1086, %v966
    %v1088 = vpop.permute.xlu0 %1087
    %1090 = vset.pattern.permute.xlu0 1
    %1091 = vperm.xlu0 %1090, %v967
    %v1092 = vpop.permute.xlu0 %1091
    %1094 = vset.pattern.permute.xlu0 1
    %1095 = vperm.xlu0 %1094, %v968
    %v1096 = vpop.permute.xlu0 %1095
    %1098 = vset.pattern.permute.xlu0 1
    %1099 = vperm.xlu0 %1098, %v969
    %v1100 = vpop.permute.xlu0 %1099
    %1102 = vset.pattern.permute.xlu0 1
    %1103 = vperm.xlu0 %1102, %v970
    %v1104 = vpop.permute.xlu0 %1103
    %1106 = vset.pattern.permute.xlu0 1
    %1107 = vperm.xlu0 %1106, %v971
    %v1108 = vpop.permute.xlu0 %1107
    %1110 = vset.pattern.permute.xlu0 1
    %1111 = vperm.xlu0 %1110, %v972
    %v1112 = vpop.permute.xlu0 %1111
    %1114 = vset.pattern.permute.xlu0 1
    %1115 = vperm.xlu0 %1114, %v973
    %v1116 = vpop.permute.xlu0 %1115
    %1118 = vset.pattern.permute.xlu0 1
    %1119 = vperm.xlu0 %1118, %v974
    %v1120 = vpop.permute.xlu0 %1119
    %1122 = vset.pattern.permute.xlu0 1
    %1123 = vperm.xlu0 %1122, %v975
    %v1124 = vpop.permute.xlu0 %1123
    %1126 = vset.pattern.permute.xlu0 1
    %1127 = vperm.xlu0 %1126, %v976
    %v1128 = vpop.permute.xlu0 %1127
    %1130 = vset.pattern.permute.xlu0 1
    %1131 = vperm.xlu0 %1130, %v977
    %v1132 = vpop.permute.xlu0 %1131
    %1134 = vset.pattern.permute.xlu0 1
    %1135 = vperm.xlu0 %1134, %v978
    %v1136 = vpop.permute.xlu0 %1135
    %1138 = vset.pattern.permute.xlu0 1
    %1139 = vperm.xlu0 %1138, %v979
    %v1140 = vpop.permute.xlu0 %1139
    %v1142 = vperm.slane %v980, 1
    %v1143 = vmul.f32 %v1080, %v1142
    %v1144 = vmul.f32 %v1084, %v1142
    %v1145 = vmul.f32 %v1088, %v1142
    %v1146 = vmul.f32 %v1092, %v1142
    %v1147 = vmul.f32 %v1096, %v1142
    %v1148 = vmul.f32 %v1100, %v1142
    %v1149 = vmul.f32 %v1104, %v1142
    %v1150 = vmul.f32 %v1108, %v1142
    %v1151 = vmul.f32 %v1112, %v1142
    %v1152 = vmul.f32 %v1116, %v1142
    %v1153 = vmul.f32 %v1120, %v1142
    %v1154 = vmul.f32 %v1124, %v1142
    %v1155 = vmul.f32 %v1128, %v1142
    %v1156 = vmul.f32 %v1132, %v1142
    %v1157 = vmul.f32 %v1136, %v1142
    %v1158 = vmul.f32 %v1140, %v1142
    %v1159 = vadd.f32 %v1062, %v1143
    %v1160 = vadd.f32 %v1063, %v1144
    %v1161 = vadd.f32 %v1064, %v1145
    %v1162 = vadd.f32 %v1065, %v1146
    %v1163 = vadd.f32 %v1066, %v1147
    %v1164 = vadd.f32 %v1067, %v1148
    %v1165 = vadd.f32 %v1068, %v1149
    %v1166 = vadd.f32 %v1069, %v1150
    %v1167 = vadd.f32 %v1070, %v1151
    %v1168 = vadd.f32 %v1071, %v1152
    %v1169 = vadd.f32 %v1072, %v1153
    %v1170 = vadd.f32 %v1073, %v1154
    %v1171 = vadd.f32 %v1074, %v1155
    %v1172 = vadd.f32 %v1075, %v1156
    %v1173 = vadd.f32 %v1076, %v1157
    %v1174 = vadd.f32 %v1077, %v1158
    %1175 = vset.pattern.permute.xlu0 2
    %1176 = vperm.xlu0 %1175, %v964
    %v1177 = vpop.permute.xlu0 %1176
    %1179 = vset.pattern.permute.xlu0 2
    %1180 = vperm.xlu0 %1179, %v965
    %v1181 = vpop.permute.xlu0 %1180
    %1183 = vset.pattern.permute.xlu0 2
    %1184 = vperm.xlu0 %1183, %v966
    %v1185 = vpop.permute.xlu0 %1184
    %1187 = vset.pattern.permute.xlu0 2
    %1188 = vperm.xlu0 %1187, %v967
    %v1189 = vpop.permute.xlu0 %1188
    %1191 = vset.pattern.permute.xlu0 2
    %1192 = vperm.xlu0 %1191, %v968
    %v1193 = vpop.permute.xlu0 %1192
    %1195 = vset.pattern.permute.xlu0 2
    %1196 = vperm.xlu0 %1195, %v969
    %v1197 = vpop.permute.xlu0 %1196
    %1199 = vset.pattern.permute.xlu0 2
    %1200 = vperm.xlu0 %1199, %v970
    %v1201 = vpop.permute.xlu0 %1200
    %1203 = vset.pattern.permute.xlu0 2
    %1204 = vperm.xlu0 %1203, %v971
    %v1205 = vpop.permute.xlu0 %1204
    %1207 = vset.pattern.permute.xlu0 2
    %1208 = vperm.xlu0 %1207, %v972
    %v1209 = vpop.permute.xlu0 %1208
    %1211 = vset.pattern.permute.xlu0 2
    %1212 = vperm.xlu0 %1211, %v973
    %v1213 = vpop.permute.xlu0 %1212
    %1215 = vset.pattern.permute.xlu0 2
    %1216 = vperm.xlu0 %1215, %v974
    %v1217 = vpop.permute.xlu0 %1216
    %1219 = vset.pattern.permute.xlu0 2
    %1220 = vperm.xlu0 %1219, %v975
    %v1221 = vpop.permute.xlu0 %1220
    %1223 = vset.pattern.permute.xlu0 2
    %1224 = vperm.xlu0 %1223, %v976
    %v1225 = vpop.permute.xlu0 %1224
    %1227 = vset.pattern.permute.xlu0 2
    %1228 = vperm.xlu0 %1227, %v977
    %v1229 = vpop.permute.xlu0 %1228
    %1231 = vset.pattern.permute.xlu0 2
    %1232 = vperm.xlu0 %1231, %v978
    %v1233 = vpop.permute.xlu0 %1232
    %1235 = vset.pattern.permute.xlu0 2
    %1236 = vperm.xlu0 %1235, %v979
    %v1237 = vpop.permute.xlu0 %1236
    %v1239 = vperm.slane %v980, 2
    %v1240 = vmul.f32 %v1177, %v1239
    %v1241 = vmul.f32 %v1181, %v1239
    %v1242 = vmul.f32 %v1185, %v1239
    %v1243 = vmul.f32 %v1189, %v1239
    %v1244 = vmul.f32 %v1193, %v1239
    %v1245 = vmul.f32 %v1197, %v1239
    %v1246 = vmul.f32 %v1201, %v1239
    %v1247 = vmul.f32 %v1205, %v1239
    %v1248 = vmul.f32 %v1209, %v1239
    %v1249 = vmul.f32 %v1213, %v1239
    %v1250 = vmul.f32 %v1217, %v1239
    %v1251 = vmul.f32 %v1221, %v1239
    %v1252 = vmul.f32 %v1225, %v1239
    %v1253 = vmul.f32 %v1229, %v1239
    %v1254 = vmul.f32 %v1233, %v1239
    %v1255 = vmul.f32 %v1237, %v1239
    %v1256 = vadd.f32 %v1159, %v1240
    %v1257 = vadd.f32 %v1160, %v1241
    %v1258 = vadd.f32 %v1161, %v1242
    %v1259 = vadd.f32 %v1162, %v1243
    %v1260 = vadd.f32 %v1163, %v1244
    %v1261 = vadd.f32 %v1164, %v1245
    %v1262 = vadd.f32 %v1165, %v1246
    %v1263 = vadd.f32 %v1166, %v1247
    %v1264 = vadd.f32 %v1167, %v1248
    %v1265 = vadd.f32 %v1168, %v1249
    %v1266 = vadd.f32 %v1169, %v1250
    %v1267 = vadd.f32 %v1170, %v1251
    %v1268 = vadd.f32 %v1171, %v1252
    %v1269 = vadd.f32 %v1172, %v1253
    %v1270 = vadd.f32 %v1173, %v1254
    %v1271 = vadd.f32 %v1174, %v1255
    %v1274 = vrot.slane %v959, 1
    %v1275 = vrot.slane %v959, 2
    %v1276 = vrot.slane %v959, 3
    %v1277 = vrot.slane %v959, 4
    %v1278 = vrot.slane %v959, 5
    %v1279 = vrot.slane %v959, 6
    %v1280 = vrot.slane %v959, 7
    %v1281 = vrot.slane %v962, 1
    %v1282 = vrot.slane %v962, 2
    %v1283 = vrot.slane %v962, 3
    %v1284 = vrot.slane %v962, 4
    %v1285 = vrot.slane %v962, 5
    %v1286 = vrot.slane %v962, 6
    %v1287 = vrot.slane %v962, 7
    %v1288 = vperm.slane %v959, 0
    %v1289 = vperm.slane %v1274, 0
    %v1290 = vperm.slane %v1275, 0
    %v1291 = vperm.slane %v1276, 0
    %v1292 = vperm.slane %v1277, 0
    %v1293 = vperm.slane %v1278, 0
    %v1294 = vperm.slane %v1279, 0
    %v1295 = vperm.slane %v1280, 0
    %v1296 = vperm.slane %v962, 0
    %v1297 = vperm.slane %v1281, 0
    %v1298 = vperm.slane %v1282, 0
    %v1299 = vperm.slane %v1283, 0
    %v1300 = vperm.slane %v1284, 0
    %v1301 = vperm.slane %v1285, 0
    %v1302 = vperm.slane %v1286, 0
    %v1303 = vperm.slane %v1287, 0
    %v1320 = vadd.f32 %v871, %v1288
    %v1321 = vadd.f32 %v874, %v1289
    %v1322 = vadd.f32 %v877, %v1290
    %v1323 = vadd.f32 %v880, %v1291
    %v1324 = vadd.f32 %v883, %v1292
    %v1325 = vadd.f32 %v886, %v1293
    %v1326 = vadd.f32 %v889, %v1294
    %v1327 = vadd.f32 %v892, %v1295
    %v1328 = vadd.f32 %v895, %v1296
    %v1329 = vadd.f32 %v898, %v1297
    %v1330 = vadd.f32 %v901, %v1298
    %v1331 = vadd.f32 %v904, %v1299
    %v1332 = vadd.f32 %v907, %v1300
    %v1333 = vadd.f32 %v910, %v1301
    %v1334 = vadd.f32 %v913, %v1302
    %v1335 = vadd.f32 %v916, %v1303
    %v1336 = vadd.f32 %v1320, %v1256
    %v1337 = vadd.f32 %v1321, %v1257
    %v1338 = vadd.f32 %v1322, %v1258
    %v1339 = vadd.f32 %v1323, %v1259
    %v1340 = vadd.f32 %v1324, %v1260
    %v1341 = vadd.f32 %v1325, %v1261
    %v1342 = vadd.f32 %v1326, %v1262
    %v1343 = vadd.f32 %v1327, %v1263
    %v1344 = vadd.f32 %v1328, %v1264
    %v1345 = vadd.f32 %v1329, %v1265
    %v1346 = vadd.f32 %v1330, %v1266
    %v1347 = vadd.f32 %v1331, %v1267
    %v1348 = vadd.f32 %v1332, %v1268
    %v1349 = vadd.f32 %v1333, %v1269
    %v1350 = vadd.f32 %v1334, %v1270
    %v1351 = vadd.f32 %v1335, %v1271
    %v1352 = vld [vmem:[%s0] sm:$0xff]
    %v1353 = vld [vmem:[%s0 + $0x8] sm:$0xff]
    %v1354 = vmul.f32 %v1352, 6.437752
    %v1355 = vmul.f32 %v1353, 6.437752
    %v1356 = vmul.f32 %v1354, 1.442695
    %v1357 = vpow.pop %v1356
    %v1358 = vmul.f32 %v1355, 1.442695
    %v1359 = vpow.pop %v1358
    %v1360 = vsub.f32 %v1357, 1.0
    %v1361 = vsub.f32 %v1359, 1.0
    %vm1362 = vcmp.lt.f32.partialorder %v1354, 0.001
    %vm1363 = vcmp.lt.f32.partialorder %v1355, 0.001
    %v1364 = vmul.f32 %v1354, 0.5
    %v1365 = vmul.f32 %v1355, 0.5
    %v1366 = vadd.f32 %v1364, 1.0
    %v1367 = vadd.f32 %v1365, 1.0
    %v1368 = vmul.f32 %v1354, %v1366
    %v1369 = vmul.f32 %v1355, %v1367
    %v1370 = vsel %vm1362, %v1368, %v1360
    %v1371 = vsel %vm1363, %v1369, %v1361
    %v1372 = vmul.f32 %v1370, 0.15533373
    %v1373 = vmul.f32 %v1371, 0.15533373
    %v1374 = vrsqrt.pop %v1372
    %v1375 = vmul.f32 %v1374, %v1372
    %v1376 = vmul.f32 %v1375, %v1374
    %v1377 = vmul.f32 0.5, %v1376
    %v1378 = vsub.f32 1.5, %v1377
    %v1379 = vmul.f32 %v1374, %v1378
    %vm1380 = vweird.f32 %v1372
    %vm1381 = vweird.f32 %v1374
    %vm1382 = vmor %vm1380, %vm1381
    %v1383 = vsel %vm1382, %v1374, %v1379
    %v1384 = vrsqrt.pop %v1373
    %v1385 = vmul.f32 %v1384, %v1373
    %v1386 = vmul.f32 %v1385, %v1384
    %v1387 = vmul.f32 0.5, %v1386
    %v1388 = vsub.f32 1.5, %v1387
    %v1389 = vmul.f32 %v1384, %v1388
    %vm1390 = vweird.f32 %v1373
    %vm1391 = vweird.f32 %v1384
    %vm1392 = vmor %vm1390, %vm1391
    %v1393 = vsel %vm1392, %v1384, %v1389
    %v1396 = vrot.slane %v1383, 1
    %v1397 = vrot.slane %v1383, 2
    %v1398 = vrot.slane %v1383, 3
    %v1399 = vrot.slane %v1383, 4
    %v1400 = vrot.slane %v1383, 5
    %v1401 = vrot.slane %v1383, 6
    %v1402 = vrot.slane %v1383, 7
    %v1403 = vrot.slane %v1393, 1
    %v1404 = vrot.slane %v1393, 2
    %v1405 = vrot.slane %v1393, 3
    %v1406 = vrot.slane %v1393, 4
    %v1407 = vrot.slane %v1393, 5
    %v1408 = vrot.slane %v1393, 6
    %v1409 = vrot.slane %v1393, 7
    %v1410 = vperm.slane %v1383, 0
    %v1411 = vperm.slane %v1396, 0
    %v1412 = vperm.slane %v1397, 0
    %v1413 = vperm.slane %v1398, 0
    %v1414 = vperm.slane %v1399, 0
    %v1415 = vperm.slane %v1400, 0
    %v1416 = vperm.slane %v1401, 0
    %v1417 = vperm.slane %v1402, 0
    %v1418 = vperm.slane %v1393, 0
    %v1419 = vperm.slane %v1403, 0
    %v1420 = vperm.slane %v1404, 0
    %v1421 = vperm.slane %v1405, 0
    %v1422 = vperm.slane %v1406, 0
    %v1423 = vperm.slane %v1407, 0
    %v1424 = vperm.slane %v1408, 0
    %v1425 = vperm.slane %v1409, 0
    %1426 = vset.pattern.permute.xlu0 0
    %1427 = vperm.xlu0 %1426, %v1410
    %v1428 = vpop.permute.xlu0 %1427
    %1430 = vset.pattern.permute.xlu0 0
    %1431 = vperm.xlu0 %1430, %v1411
    %v1432 = vpop.permute.xlu0 %1431
    %1434 = vset.pattern.permute.xlu0 0
    %1435 = vperm.xlu0 %1434, %v1412
    %v1436 = vpop.permute.xlu0 %1435
    %1438 = vset.pattern.permute.xlu0 0
    %1439 = vperm.xlu0 %1438, %v1413
    %v1440 = vpop.permute.xlu0 %1439
    %1442 = vset.pattern.permute.xlu0 0
    %1443 = vperm.xlu0 %1442, %v1414
    %v1444 = vpop.permute.xlu0 %1443
    %1446 = vset.pattern.permute.xlu0 0
    %1447 = vperm.xlu0 %1446, %v1415
    %v1448 = vpop.permute.xlu0 %1447
    %1450 = vset.pattern.permute.xlu0 0
    %1451 = vperm.xlu0 %1450, %v1416
    %v1452 = vpop.permute.xlu0 %1451
    %1454 = vset.pattern.permute.xlu0 0
    %1455 = vperm.xlu0 %1454, %v1417
    %v1456 = vpop.permute.xlu0 %1455
    %1458 = vset.pattern.permute.xlu0 0
    %1459 = vperm.xlu0 %1458, %v1418
    %v1460 = vpop.permute.xlu0 %1459
    %1462 = vset.pattern.permute.xlu0 0
    %1463 = vperm.xlu0 %1462, %v1419
    %v1464 = vpop.permute.xlu0 %1463
    %1466 = vset.pattern.permute.xlu0 0
    %1467 = vperm.xlu0 %1466, %v1420
    %v1468 = vpop.permute.xlu0 %1467
    %1470 = vset.pattern.permute.xlu0 0
    %1471 = vperm.xlu0 %1470, %v1421
    %v1472 = vpop.permute.xlu0 %1471
    %1474 = vset.pattern.permute.xlu0 0
    %1475 = vperm.xlu0 %1474, %v1422
    %v1476 = vpop.permute.xlu0 %1475
    %1478 = vset.pattern.permute.xlu0 0
    %1479 = vperm.xlu0 %1478, %v1423
    %v1480 = vpop.permute.xlu0 %1479
    %1482 = vset.pattern.permute.xlu0 0
    %1483 = vperm.xlu0 %1482, %v1424
    %v1484 = vpop.permute.xlu0 %1483
    %1486 = vset.pattern.permute.xlu0 0
    %1487 = vperm.xlu0 %1486, %v1425
    %v1488 = vpop.permute.xlu0 %1487
    %v1490 = vmul.f32 %v1336, %v1428
    %v1491 = vmul.f32 %v1337, %v1432
    %v1492 = vmul.f32 %v1338, %v1436
    %v1493 = vmul.f32 %v1339, %v1440
    %v1494 = vmul.f32 %v1340, %v1444
    %v1495 = vmul.f32 %v1341, %v1448
    %v1496 = vmul.f32 %v1342, %v1452
    %v1497 = vmul.f32 %v1343, %v1456
    %v1498 = vmul.f32 %v1344, %v1460
    %v1499 = vmul.f32 %v1345, %v1464
    %v1500 = vmul.f32 %v1346, %v1468
    %v1501 = vmul.f32 %v1347, %v1472
    %v1502 = vmul.f32 %v1348, %v1476
    %v1503 = vmul.f32 %v1349, %v1480
    %v1504 = vmul.f32 %v1350, %v1484
    %v1505 = vmul.f32 %v1351, %v1488
    %1506 = vst [vmem:[#allocation13] sm:$0xff] %v1490
    %1507 = vst [vmem:[#allocation13 + $0x8] sm:$0xff] %v1491
    %1508 = vst [vmem:[#allocation13 + $0x10] sm:$0xff] %v1492
    %1509 = vst [vmem:[#allocation13 + $0x18] sm:$0xff] %v1493
    %1510 = vst [vmem:[#allocation13 + $0x20] sm:$0xff] %v1494
    %1511 = vst [vmem:[#allocation13 + $0x28] sm:$0xff] %v1495
    %1512 = vst [vmem:[#allocation13 + $0x30] sm:$0xff] %v1496
    %1513 = vst [vmem:[#allocation13 + $0x38] sm:$0xff] %v1497
    %1514 = vst [vmem:[#allocation13 + $0x40] sm:$0xff] %v1498
    %1515 = vst [vmem:[#allocation13 + $0x48] sm:$0xff] %v1499
    %1516 = vst [vmem:[#allocation13 + $0x50] sm:$0xff] %v1500
    %1517 = vst [vmem:[#allocation13 + $0x58] sm:$0xff] %v1501
    %1518 = vst [vmem:[#allocation13 + $0x60] sm:$0xff] %v1502
    %1519 = vst [vmem:[#allocation13 + $0x68] sm:$0xff] %v1503
    %1520 = vst [vmem:[#allocation13 + $0x70] sm:$0xff] %v1504
    %1521 = vst [vmem:[#allocation13 + $0x78] sm:$0xff] %v1505
    // Predicated region
    $region82: #{tpu_custom_call.1} parent=1 // pred_check
      _
    $region83: #{tpu_custom_call.1} parent=1 // pred_check_branch
      %1523 = sbr.rel (0) target = $region85
    $region84: #{tpu_custom_call.1} parent=1 // pred_region
      %1525 = vsyncadd [#allocation4], 0
      %s1526 = sshll.u32 [#allocation13], 4
      %s1527 = int_to_ptr.vmem [resolvable:$true] %s1526
      %s1528 = sshll.u32 %s14, 4
      %s1529 = int_to_ptr.hbm [resolvable:$true] %s1528
      %1534 = dma.vmem_to_hbm [thread:$0]  %s1527, 2048, %s1529, [#allocation4], 128, 128, 8
    $region85: #{tpu_custom_call.1} parent=1 // pred_fallthru
      _
    // Predicated region
    $region86: #{tpu_custom_call.1} parent=1 // pred_check
      _
    $region87: #{tpu_custom_call.1} parent=1 // pred_check_branch
      %1536 = sbr.rel (0) target = $region89
    $region88: #{tpu_custom_call.1} parent=1 // pred_region
      %1538 = dma.done [#allocation4], 2048
    $region89: #{tpu_custom_call.1} parent=1 // pred_fallthru
      _
    %1539 = vsyncpa [#allocation3], 1
    %1540 = vsyncpa [#allocation6], 1
    %1541 = vsyncpa [#allocation9], 1
    %1542 = vsyncpa [#allocation12], 1
    %1543 = vsyncpa [#allocation4], 1

</llo_original>
